<compile_context>
chip_gen: v7x
topology: tpu7x:2x2x1
jax: 0.10.0
libtpu: 0.0.40
codegen_flags: <defaults>
</compile_context>

<pallas_src>
import functools

import jax
import jax.numpy as jnp
from jax.experimental import pallas as pl
from jax.experimental.pallas import tpu as pltpu


# ---------------------------------------------------------------------------
# Generation detection / defaults
# ---------------------------------------------------------------------------
def _tpu_defaults():
    """Returns (generation, tm_default, ti_default, vmem_limit_cap_bytes)."""
    kind = ""
    try:
        kind = jax.devices()[0].device_kind.lower()
    except Exception:
        pass
    vmem_phys = None
    try:
        vmem_phys = int(pltpu.get_tpu_info().vmem_capacity_bytes)
    except Exception:
        pass

    if "v7" in kind:
        # 64 MiB VMEM per TC: smaller I-tile, leave headroom for compiler scratch.
        phys = vmem_phys or (64 << 20)
        return "v7x", 512, 256, int(phys * 0.85)
    if "v6" in kind or "v5" in kind or "v4" in kind:
        # 128 MiB VMEM: big token tile for prefill, deep weight pipelining.
        phys = vmem_phys or (128 << 20)
        return "v6e_v5e", 512, 512, int(min(phys * 0.85, 110 << 20))
    # Unknown hardware: conservative (fits a 64 MiB-class part).
    phys = vmem_phys or (64 << 20)
    return "unknown", 256, 256, int(phys * 0.80)


def _pick_i_tile(I, target):
    """Largest tile <= target dividing I, preferring 256- then 128-lane alignment."""
    target = min(target, I)
    for align in (256, 128):
        t = (target // align) * align
        while t >= align:
            if I % t == 0:
                return t
            t -= align
    return I  # untiled fallback (small / odd intermediate size)


# ---------------------------------------------------------------------------
# Kernel
# ---------------------------------------------------------------------------
def _llama_mlp_kernel(x_ref, wgu_ref, wd_ref, o_ref, acc_ref, *, ti, n_sub):
    """One (token-tile, I-tile) grid step.

    x_ref   : (tm, H)        activation tile (constant across the k axis)
    wgu_ref : (H, 2*ti)      fused [gate_k | up_k] weight tile
    wd_ref  : (ti, H)        down-proj weight tile
    o_ref   : (tm, H)        output tile (written on the last k step)
    acc_ref : (tm, H) f32    VMEM accumulator, resident across the k axis
    """
    k = pl.program_id(1)

    @pl.when(k == 0)
    def _init():
        acc_ref[...] = jnp.zeros_like(acc_ref)

    tm = x_ref.shape[0]
    sub = tm // n_sub
    w_dtype = wd_ref.dtype

    # Independent row sub-tiles: the VPU/EUP activation of one overlaps the MXU
    # down-matmul of the other (both chains are data-independent).
    for s in range(n_sub):
        rows = pl.ds(s * sub, sub)
        gu = jnp.dot(x_ref[rows, :], wgu_ref[...],
                     preferred_element_type=jnp.float32)            # (sub, 2*ti) f32
        gate = gu[:, :ti]                                            # lane-tile aligned
        up = gu[:, ti:]
        act = gate * jax.nn.sigmoid(gate) * up                      # SiluAndMul, f32 (EUP)
        acc_ref[rows, :] += jnp.dot(act.astype(w_dtype), wd_ref[...],
                                    preferred_element_type=jnp.float32)

    @pl.when(k == pl.num_programs(1) - 1)
    def _finalize():
        o_ref[...] = acc_ref[...].astype(o_ref.dtype)


# ---------------------------------------------------------------------------
# One-time weight preparation (load time, NOT per forward)
# ---------------------------------------------------------------------------
def prepare_llama_mlp_weights(w_gate_up, w_down, *, ti=None):
    """w_gate_up: [2I, H] (vLLM MergedColumnParallelLinear, [gate; up] rows).
    w_down:    [H, I]   (vLLM RowParallelLinear).
    Returns (w_gu_fused [H, 2I] lane-interleaved per I-tile of width ti, w_down_t [I, H], ti).
    """
    two_I, H = w_gate_up.shape
    I = two_I // 2
    if ti is None:
        _, _, ti_d, _ = _tpu_defaults()
        ti = _pick_i_tile(I, ti_d)
    assert I % ti == 0, "intermediate_size must be divisible by the I-tile"
    assert ti == I or ti % 128 == 0, "I-tile must be a multiple of 128 (prefer 256)"
    nk = I // ti
    w_gate = w_gate_up[:I, :].T                      # [H, I]
    w_up = w_gate_up[I:, :].T                        # [H, I]
    wg = w_gate.reshape(H, nk, 1, ti)
    wu = w_up.reshape(H, nk, 1, ti)
    w_gu_fused = jnp.concatenate([wg, wu], axis=2).reshape(H, 2 * I)
    w_down_t = w_down.T                              # [I, H]
    return w_gu_fused, w_down_t, ti


# ---------------------------------------------------------------------------
# Forward wrapper
# ---------------------------------------------------------------------------
def llama_mlp(x, w_gu_fused, w_down_t, *, ti, tm=None):
    """x: [T, H]; weights from prepare_llama_mlp_weights(..., ti=ti) (same ti)."""
    T, H = x.shape
    I, H2 = w_down_t.shape
    assert H2 == H and w_gu_fused.shape == (H, 2 * I)

    _, tm_d, _, vmem_cap = _tpu_defaults()
    if tm is None:
        tm = tm_d
    tm = min(tm, T)
    if tm < T:
        # Last token tile may be padded; garbage rows pass through sigmoid/exp but their
        # output stores are masked, so results stay correct.
        assert tm % 8 == 0, "token tile must be a multiple of 8"
    ti = min(ti, I)
    assert I % ti == 0, "I must divide evenly by ti (padding would corrupt the reduction)"
    assert ti == I or ti % 128 == 0, "I-tile must be a multiple of 128 (prefer 256)"

    nt = pl.cdiv(T, tm)
    nk = I // ti
    n_sub = 2 if (tm % 16 == 0 and tm >= 128) else 1

    x_bytes = x.dtype.itemsize
    w_bytes = w_gu_fused.dtype.itemsize

    # VMEM budget: double-buffered x / weight / out tiles, f32 accumulator, plus the
    # f32 gu/act intermediates (they exceed the vreg file and live in VMEM).
    vmem_est = (
        2 * tm * H * x_bytes            # x tile (double-buffered)
        + 2 * H * (2 * ti) * w_bytes    # fused gate/up weight tile
        + 2 * ti * H * w_bytes          # down-proj weight tile
        + 2 * tm * H * x_bytes          # out tile
        + tm * H * 4                    # f32 accumulator
        + tm * (2 * ti) * 4             # f32 gu intermediate
        + tm * ti * 4                   # f32 act intermediate
    )
    vmem_limit = int(min(max(vmem_est + (8 << 20), 32 << 20), vmem_cap))

    cost = pl.CostEstimate(
        flops=6 * T * H * I,
        transcendentals=T * I,
        bytes_accessed=2 * T * H * x_bytes + nt * (3 * H * I * w_bytes),
    )

    return pl.pallas_call(
        functools.partial(_llama_mlp_kernel, ti=ti, n_sub=n_sub),
        out_shape=jax.ShapeDtypeStruct((T, H), x.dtype),
        grid_spec=pltpu.PrefetchScalarGridSpec(
            num_scalar_prefetch=0,
            grid=(nt, nk),
            in_specs=[
                pl.BlockSpec((tm, H), lambda i, k: (i, 0)),        # x (constant in k)
                pl.BlockSpec((H, 2 * ti), lambda i, k: (0, k)),    # fused [gate|up] tile
                pl.BlockSpec((ti, H), lambda i, k: (k, 0)),        # down-proj tile
            ],
            out_specs=pl.BlockSpec((tm, H), lambda i, k: (i, 0)),  # resident across k
            scratch_shapes=[pltpu.VMEM((tm, H), jnp.float32)],
        ),
        compiler_params=pltpu.CompilerParams(
            dimension_semantics=("parallel", "arbitrary"),
            vmem_limit_bytes=vmem_limit,
        ),
        cost_estimate=cost,
    )(x, w_gu_fused, w_down_t)


def llama_mlp_ref(x, w_gate_up, w_down):
    """Pure-JAX f32 reference matching the PyTorch module (vLLM weight layouts)."""
    I = w_gate_up.shape[0] // 2
    xf = x.astype(jnp.float32)
    gate_up = xf @ w_gate_up.astype(jnp.float32).T         # [T, 2I]
    gate, up = gate_up[:, :I], gate_up[:, I:]
    return (jax.nn.silu(gate) * up) @ w_down.astype(jnp.float32).T


if __name__ == "__main__":
    # Small, (8,128)-friendly shapes consistent with the module; tm/ti chosen so the demo
    # exercises both grid axes (2 token tiles x 2 I-tiles with accumulation) and the
    # 2-way sub-tile overlap path. Production dtype: bf16 activations & weights.
    T, H, I = 256, 256, 512
    tm, ti = 128, 256
    dtype = jnp.bfloat16

    key = jax.random.PRNGKey(0)
    kx, kgu, kd = jax.random.split(key, 3)
    x = jax.random.normal(kx, (T, H), dtype=jnp.float32).astype(dtype)
    # vLLM storage layouts: [out_features, in_features].
    w_gate_up = (jax.random.normal(kgu, (2 * I, H), dtype=jnp.float32) * 0.02).astype(dtype)
    w_down = (jax.random.normal(kd, (H, I), dtype=jnp.float32) * 0.02).astype(dtype)

    # One-time weight preparation (load time), then the jit'd forward.
    w_gu_fused, w_down_t, ti = prepare_llama_mlp_weights(w_gate_up, w_down, ti=ti)
    fwd = jax.jit(functools.partial(llama_mlp, tm=tm, ti=ti))
    out = jax.block_until_ready(fwd(x, w_gu_fused, w_down_t))

    ref = llama_mlp_ref(x, w_gate_up, w_down)
    assert out.shape == (T, H)
    err = float(jnp.max(jnp.abs(out.astype(jnp.float32) - ref)))
    # bf16 inputs + bf16 activation cast before the down matmul -> small deviation vs f32 ref.
    assert err < 2e-2, f"mismatch vs reference: max abs err = {err}"
    print("KERNEL_OK")
</pallas_src>

<mosaic_0001>
module attributes {stable_mosaic.version = 11 : i64} {
  func.func @_llama_mlp_kernel(%arg0: i32, %arg1: i32, %arg2: memref<128x256xbf16, #tpu.memory_space<vmem>>, %arg3: memref<256x512xbf16, #tpu.memory_space<vmem>>, %arg4: memref<256x256xbf16, #tpu.memory_space<vmem>>, %arg5: memref<128x256xbf16, #tpu.memory_space<vmem>>, %arg6: memref<128x256xf32, #tpu.memory_space<vmem>>) attributes {dimension_semantics = [#tpu.dimension_semantics<parallel>, #tpu.dimension_semantics<arbitrary>], iteration_bounds = array<i64: 2, 2>, scalar_prefetch = 0 : i64, scratch_operands = 1 : i64, tpu.core_type = #tpu.core_type<tc>, window_params = [{transform_indices = @transform_0, window_bounds = array<i64: 128, 256>}, {transform_indices = @transform_1, window_bounds = array<i64: 256, 512>}, {transform_indices = @transform_2, window_bounds = array<i64: 256, 256>}, {transform_indices = @transform_3, window_bounds = array<i64: 128, 256>}]} {
    %c0_i32 = arith.constant 0 : i32
    %0 = arith.cmpi eq, %arg1, %c0_i32 : i32
    %1 = arith.extui %0 : i1 to i32
    %c0_i32_0 = arith.constant 0 : i32
    %2 = arith.cmpi ne, %1, %c0_i32_0 : i32
    scf.if %2 {
      %cst_25 = arith.constant 0.000000e+00 : f32
      %42 = vector.broadcast %cst_25 : f32 to vector<128x256xf32>
      %c0_26 = arith.constant 0 : index
      %c0_27 = arith.constant 0 : index
      %43 = vector.load %arg6[%c0_26, %c0_27] : memref<128x256xf32, #tpu.memory_space<vmem>>, vector<128x256xf32>
      tpu.vector_store %arg6[%c0_26, %c0_27], %42 {strides = array<i32>} : memref<128x256xf32, #tpu.memory_space<vmem>>, vector<128x256xf32>,
    } else {
    }
    %c0 = arith.constant 0 : index
    %c0_1 = arith.constant 0 : index
    %3 = vector.load %arg2[%c0, %c0_1] : memref<128x256xbf16, #tpu.memory_space<vmem>>, vector<64x256xbf16>
    %c0_2 = arith.constant 0 : index
    %c0_3 = arith.constant 0 : index
    %4 = vector.load %arg3[%c0_2, %c0_3] : memref<256x512xbf16, #tpu.memory_space<vmem>>, vector<256x512xbf16>
    %cst = arith.constant dense<0.000000e+00> : vector<64x512xf32>
    %5 = tpu.matmul %3, %4, %cst {dimension_numbers = #tpu.dot_dimension_numbers<[1], [0], [0], [1], [0, 0, 1, 1], [], []>} : vector<64x256xbf16>, vector<256x512xbf16>, vector<64x512xf32> -> vector<64x512xf32>
    %6 = vector.extract_strided_slice %5 {offsets = [0, 0], sizes = [64, 256], strides = [1, 1]} : vector<64x512xf32> to vector<64x256xf32>
    %7 = vector.extract_strided_slice %5 {offsets = [0, 256], sizes = [64, 256], strides = [1, 1]} : vector<64x512xf32> to vector<64x256xf32>
    %8 = arith.negf %6 : vector<64x256xf32>
    %9 = math.exp %8 : vector<64x256xf32>
    %cst_4 = arith.constant 1.000000e+00 : f32
    %10 = vector.broadcast %cst_4 : f32 to vector<64x256xf32>
    %11 = arith.addf %10, %9 : vector<64x256xf32>
    %12 = arith.divf %10, %11 : vector<64x256xf32>
    %13 = arith.mulf %6, %12 : vector<64x256xf32>
    %14 = arith.mulf %13, %7 : vector<64x256xf32>
    %c0_5 = arith.constant 0 : index
    %c0_6 = arith.constant 0 : index
    %15 = vector.load %arg6[%c0_5, %c0_6] : memref<128x256xf32, #tpu.memory_space<vmem>>, vector<64x256xf32>
    %16 = arith.truncf %14 : vector<64x256xf32> to vector<64x256xbf16>
    %c0_7 = arith.constant 0 : index
    %c0_8 = arith.constant 0 : index
    %17 = vector.load %arg4[%c0_7, %c0_8] : memref<256x256xbf16, #tpu.memory_space<vmem>>, vector<256x256xbf16>
    %cst_9 = arith.constant dense<0.000000e+00> : vector<64x256xf32>
    %18 = tpu.matmul %16, %17, %cst_9 {dimension_numbers = #tpu.dot_dimension_numbers<[1], [0], [0], [1], [0, 0, 1, 1], [], []>} : vector<64x256xbf16>, vector<256x256xbf16>, vector<64x256xf32> -> vector<64x256xf32>
    %19 = arith.addf %15, %18 : vector<64x256xf32>
    %c0_10 = arith.constant 0 : index
    %c0_11 = arith.constant 0 : index
    %20 = vector.load %arg6[%c0_10, %c0_11] : memref<128x256xf32, #tpu.memory_space<vmem>>, vector<64x256xf32>
    tpu.vector_store %arg6[%c0_10, %c0_11], %19 {strides = array<i32>} : memref<128x256xf32, #tpu.memory_space<vmem>>, vector<64x256xf32>,
    %c64 = arith.constant 64 : index
    %c0_12 = arith.constant 0 : index
    %21 = vector.load %arg2[%c64, %c0_12] : memref<128x256xbf16, #tpu.memory_space<vmem>>, vector<64x256xbf16>
    %c0_13 = arith.constant 0 : index
    %c0_14 = arith.constant 0 : index
    %22 = vector.load %arg3[%c0_13, %c0_14] : memref<256x512xbf16, #tpu.memory_space<vmem>>, vector<256x512xbf16>
    %cst_15 = arith.constant dense<0.000000e+00> : vector<64x512xf32>
    %23 = tpu.matmul %21, %22, %cst_15 {dimension_numbers = #tpu.dot_dimension_numbers<[1], [0], [0], [1], [0, 0, 1, 1], [], []>} : vector<64x256xbf16>, vector<256x512xbf16>, vector<64x512xf32> -> vector<64x512xf32>
    %24 = vector.extract_strided_slice %23 {offsets = [0, 0], sizes = [64, 256], strides = [1, 1]} : vector<64x512xf32> to vector<64x256xf32>
    %25 = vector.extract_strided_slice %23 {offsets = [0, 256], sizes = [64, 256], strides = [1, 1]} : vector<64x512xf32> to vector<64x256xf32>
    %26 = arith.negf %24 : vector<64x256xf32>
    %27 = math.exp %26 : vector<64x256xf32>
    %cst_16 = arith.constant 1.000000e+00 : f32
    %28 = vector.broadcast %cst_16 : f32 to vector<64x256xf32>
    %29 = arith.addf %28, %27 : vector<64x256xf32>
    %30 = arith.divf %28, %29 : vector<64x256xf32>
    %31 = arith.mulf %24, %30 : vector<64x256xf32>
    %32 = arith.mulf %31, %25 : vector<64x256xf32>
    %c64_17 = arith.constant 64 : index
    %c0_18 = arith.constant 0 : index
    %33 = vector.load %arg6[%c64_17, %c0_18] : memref<128x256xf32, #tpu.memory_space<vmem>>, vector<64x256xf32>
    %34 = arith.truncf %32 : vector<64x256xf32> to vector<64x256xbf16>
    %c0_19 = arith.constant 0 : index
    %c0_20 = arith.constant 0 : index
    %35 = vector.load %arg4[%c0_19, %c0_20] : memref<256x256xbf16, #tpu.memory_space<vmem>>, vector<256x256xbf16>
    %cst_21 = arith.constant dense<0.000000e+00> : vector<64x256xf32>
    %36 = tpu.matmul %34, %35, %cst_21 {dimension_numbers = #tpu.dot_dimension_numbers<[1], [0], [0], [1], [0, 0, 1, 1], [], []>} : vector<64x256xbf16>, vector<256x256xbf16>, vector<64x256xf32> -> vector<64x256xf32>
    %37 = arith.addf %33, %36 : vector<64x256xf32>
    %c64_22 = arith.constant 64 : index
    %c0_23 = arith.constant 0 : index
    %38 = vector.load %arg6[%c64_22, %c0_23] : memref<128x256xf32, #tpu.memory_space<vmem>>, vector<64x256xf32>
    tpu.vector_store %arg6[%c64_22, %c0_23], %37 {strides = array<i32>} : memref<128x256xf32, #tpu.memory_space<vmem>>, vector<64x256xf32>,
    %c1_i32 = arith.constant 1 : i32
    %39 = arith.cmpi eq, %arg1, %c1_i32 : i32
    %40 = arith.extui %39 : i1 to i32
    %c0_i32_24 = arith.constant 0 : i32
    %41 = arith.cmpi ne, %40, %c0_i32_24 : i32
    scf.if %41 {
      %c0_25 = arith.constant 0 : index
      %c0_26 = arith.constant 0 : index
      %42 = vector.load %arg6[%c0_25, %c0_26] : memref<128x256xf32, #tpu.memory_space<vmem>>, vector<128x256xf32>
      %43 = arith.truncf %42 : vector<128x256xf32> to vector<128x256xbf16>
      %c0_27 = arith.constant 0 : index
      %c0_28 = arith.constant 0 : index
      %44 = vector.load %arg5[%c0_27, %c0_28] : memref<128x256xbf16, #tpu.memory_space<vmem>>, vector<128x256xbf16>
      tpu.vector_store %arg5[%c0_27, %c0_28], %43 {strides = array<i32>} : memref<128x256xbf16, #tpu.memory_space<vmem>>, vector<128x256xbf16>,
    } else {
    }
    return
  }
  func.func @transform_0(%arg0: i32, %arg1: i32) -> (i32, i32) {
    %c0_i32 = arith.constant 0 : i32
    %c0_i32_0 = arith.constant 0 : i32
    return %arg0, %c0_i32 : i32, i32
  }
  func.func @transform_1(%arg0: i32, %arg1: i32) -> (i32, i32) {
    %c0_i32 = arith.constant 0 : i32
    %c0_i32_0 = arith.constant 0 : i32
    return %c0_i32, %arg1 : i32, i32
  }
  func.func @transform_2(%arg0: i32, %arg1: i32) -> (i32, i32) {
    %c0_i32 = arith.constant 0 : i32
    %c0_i32_0 = arith.constant 0 : i32
    return %arg1, %c0_i32 : i32, i32
  }
  func.func @transform_3(%arg0: i32, %arg1: i32) -> (i32, i32) {
    %c0_i32 = arith.constant 0 : i32
    %c0_i32_0 = arith.constant 0 : i32
    return %arg0, %c0_i32 : i32, i32
  }
}

</mosaic_0001>

<llo_original>
// kernel: llama_mlp.1
$region0: #{llama_mlp.1}
  #allocation0 [shape = 'u32[]', space=smem, size = 0x4, offset = 0x4, fixed_abs, tag = 'smem constant byte address 0x4 - core index']
  #allocation1 [shape = 'u32[144,128]{1,0:T(1,128)}', space=vmem, size = 0x12000, scoped, tag = 'internal scratch']
  #allocation2 [shape = 'f32[128,256]{1,0:T(8,128)}', space=vmem, size = 0x20000, scoped, tag = 'scratch operand']
  %s0 = inlined_call_operand.hbm [shape: bf16[256,256], index: 0, kind: input, shape index: {}]
  %s1 = inlined_call_operand.hbm [shape: bf16[256,1024], index: 1, kind: input, shape index: {}]
  %s2 = inlined_call_operand.hbm [shape: bf16[512,256], index: 2, kind: input, shape index: {}]
  %s3 = inlined_call_operand.hbm [shape: bf16[256,256], index: 3, kind: output, shape index: {}]
  %s4 = sld [smem:[#allocation0]]
  $region65: #{llama_mlp.1} parent=0
    _
  %s6 = ssub.s32 1, %s4
  %s7 = scalar_select 0, %s6, %s4
  $region1: #{llama_mlp.1} parent=0
    #allocation3 [shape = 'u8[131072]{0}', space=vmem, size = 0x20000, scoped, tag = 'input window, operand 0']
    #allocation4 [shape = 's32[2]{0}', space=sflag, size = 0x8, scoped, tag = 'scoped memory for llama_mlp.1']
    #allocation5 [shape = 's32[2]{0}', space=sflag, size = 0x8, scoped, tag = 'scoped memory for llama_mlp.1']
    #allocation6 [shape = 'u8[524288]{0}', space=vmem, size = 0x80000, scoped, tag = 'input window, operand 1']
    #allocation7 [shape = 's32[2]{0}', space=sflag, size = 0x8, scoped, tag = 'scoped memory for llama_mlp.1']
    #allocation8 [shape = 'u8[262144]{0}', space=vmem, size = 0x40000, scoped, tag = 'input window, operand 2']
    #allocation9 [shape = 'u8[131072]{0}', space=vmem, size = 0x20000, scoped, tag = 'output window, operand 0']
    %8 = vsyncpa [#allocation4], 0
    %s9 = scalar_lea.sflag [#allocation4], 1
    %10 = vsyncpa %s9, 0
    %11 = vsyncpa [#allocation7], 0
    %s12 = scalar_lea.sflag [#allocation7], 1
    %13 = vsyncpa %s12, 0
    %14 = vsyncpa [#allocation5], 0
    %s15 = scalar_lea.sflag [#allocation5], 1
    %16 = vsyncpa %s15, 0
    loop: start=0, step=1, limit=6
    $region2: #{llama_mlp.1} parent=1 // loop_pre_header
      _
    $region3: #{llama_mlp.1} parent=1 // loop_header
      %s18 = sphi 0, %s22
      %p19 = scmp.ge.s32.totalorder %s18, 6
      %s25 = sphi 0, %s37
      %s26 = sphi 0, %s33
      %s27 = sphi 0, %s25
      %s28 = sphi 0, %s26
      %s29 = sphi 0, %s27
      %s30 = sphi 0, %s28
      %s40 = sphi 0, %s42
      %s43 = sphi 0, %s40
      %s44 = sphi 0, %s43
      %s60 = sphi 0, %s44
      %s66 = sphi 0, %s68
      %s69 = sphi 0, %s66
      %s70 = sphi 0, %s69
      %s86 = sphi 0, %s70
      %s92 = sphi 0, %s94
      %s95 = sphi 0, %s92
      %s96 = sphi 0, %s95
      %s112 = sphi 0, %s96
      %s118 = sphi 0, %s120
      %s121 = sphi 0, %s118
      %s122 = sphi 0, %s121
      %s138 = sphi 0, %s122
    $region4: #{llama_mlp.1} parent=1 // loop_header_branch
      %21 = sbr.rel (%p19) target = $region8
    $region5: #{llama_mlp.1} parent=1 // loop_body
      %s23 = ssub.s32 %s18, 1
      %s24 = ssub.s32 %s18, 2
      %s31 = sadd.s32 1, %s26
      %p32 = scmp.ge.s32.totalorder %s31, 2
      %s33 = scalar_select %p32, 0, %s31
      %s34 = sadd.s32 1, %s25
      %s35 = scalar_select %p32, %s34, %s25
      %p36 = scmp.ge.s32.totalorder %s35, 2
      %s37 = scalar_select %p36, 0, %s35
      %s38 = ssub.s32 %s25, %s37
      %p39 = scmp.eq.s32.totalorder %s38, 0
      %s41 = sadd.s32 %s40, 1
      %s42 = scalar_select %p39, %s40, %s41
      %p45 = pneg %p39
      %p46 = scmp.eq.s32.totalorder %s18, 3
      %p47 = por %p45, %p46
      %p48 = scmp.ne.s32.totalorder %s40, %s43
      %p49 = scmp.eq.s32.totalorder %s18, 0
      %p50 = por %p48, %p49
      %p51 = scmp.ne.s32.totalorder %s40, %s43
      %p52 = scmp.eq.s32.totalorder %s23, 3
      %p53 = por %p51, %p52
      %p54 = scmp.ne.s32.totalorder %s43, %s44
      %p55 = scmp.eq.s32.totalorder %s23, 0
      %p56 = por %p54, %p55
      %p57 = scmp.ne.s32.totalorder %s43, %s44
      %p58 = scmp.eq.s32.totalorder %s24, 3
      %p59 = por %p57, %p58
      %p61 = scmp.ne.s32.totalorder %s44, %s60
      %p62 = scmp.eq.s32.totalorder %s24, 0
      %p63 = por %p61, %p62
      %s64 = ssub.s32 %s26, %s33
      %p65 = scmp.eq.s32.totalorder %s64, 0
      %s67 = sadd.s32 %s66, 1
      %s68 = scalar_select %p65, %s66, %s67
      %p71 = pneg %p65
      %p72 = scmp.eq.s32.totalorder %s18, 3
      %p73 = por %p71, %p72
      %p74 = scmp.ne.s32.totalorder %s66, %s69
      %p75 = scmp.eq.s32.totalorder %s18, 0
      %p76 = por %p74, %p75
      %p77 = scmp.ne.s32.totalorder %s66, %s69
      %p78 = scmp.eq.s32.totalorder %s23, 3
      %p79 = por %p77, %p78
      %p80 = scmp.ne.s32.totalorder %s69, %s70
      %p81 = scmp.eq.s32.totalorder %s23, 0
      %p82 = por %p80, %p81
      %p83 = scmp.ne.s32.totalorder %s69, %s70
      %p84 = scmp.eq.s32.totalorder %s24, 3
      %p85 = por %p83, %p84
      %p87 = scmp.ne.s32.totalorder %s70, %s86
      %p88 = scmp.eq.s32.totalorder %s24, 0
      %p89 = por %p87, %p88
      %s90 = ssub.s32 %s26, %s33
      %p91 = scmp.eq.s32.totalorder %s90, 0
      %s93 = sadd.s32 %s92, 1
      %s94 = scalar_select %p91, %s92, %s93
      %p97 = pneg %p91
      %p98 = scmp.eq.s32.totalorder %s18, 3
      %p99 = por %p97, %p98
      %p100 = scmp.ne.s32.totalorder %s92, %s95
      %p101 = scmp.eq.s32.totalorder %s18, 0
      %p102 = por %p100, %p101
      %p103 = scmp.ne.s32.totalorder %s92, %s95
      %p104 = scmp.eq.s32.totalorder %s23, 3
      %p105 = por %p103, %p104
      %p106 = scmp.ne.s32.totalorder %s95, %s96
      %p107 = scmp.eq.s32.totalorder %s23, 0
      %p108 = por %p106, %p107
      %p109 = scmp.ne.s32.totalorder %s95, %s96
      %p110 = scmp.eq.s32.totalorder %s24, 3
      %p111 = por %p109, %p110
      %p113 = scmp.ne.s32.totalorder %s96, %s112
      %p114 = scmp.eq.s32.totalorder %s24, 0
      %p115 = por %p113, %p114
      %s116 = ssub.s32 %s25, %s37
      %p117 = scmp.eq.s32.totalorder %s116, 0
      %s119 = sadd.s32 %s118, 1
      %s120 = scalar_select %p117, %s118, %s119
      %p123 = pneg %p117
      %p124 = scmp.eq.s32.totalorder %s18, 3
      %p125 = por %p123, %p124
      %p126 = scmp.ne.s32.totalorder %s118, %s121
      %p127 = scmp.eq.s32.totalorder %s18, 0
      %p128 = por %p126, %p127
      %p129 = scmp.ne.s32.totalorder %s118, %s121
      %p130 = scmp.eq.s32.totalorder %s23, 3
      %p131 = por %p129, %p130
      %p132 = scmp.ne.s32.totalorder %s121, %s122
      %p133 = scmp.eq.s32.totalorder %s23, 0
      %p134 = por %p132, %p133
      %p135 = scmp.ne.s32.totalorder %s121, %s122
      %p136 = scmp.eq.s32.totalorder %s24, 3
      %p137 = por %p135, %p136
      %p139 = scmp.ne.s32.totalorder %s122, %s138
      %p140 = scmp.eq.s32.totalorder %s24, 0
      %p141 = por %p139, %p140
      %p142 = scmp.le.s32.totalorder 1, %s18
      %p143 = scmp.lt.s32.totalorder %s18, 5
      %p144 = pnand %p142, %p143
      %p145 = pneg %p144
      // Predicated region
      $region9: #{llama_mlp.1} parent=5 // pred_check
        _
      $region10: #{llama_mlp.1} parent=5 // pred_check_branch
        %147 = sbr.rel (%p144) target = $region12
      $region11: #{llama_mlp.1} parent=5 // pred_region
        %s148 = ssub.s32 %s18, 1
      $region12: #{llama_mlp.1} parent=5 // pred_fallthru
        _
      %p149 = scmp.lt.s32.totalorder %s18, 4
      // Predicated region
      $region13: #{llama_mlp.1} parent=5 // pred_check
        %p150 = pneg %p149
      $region14: #{llama_mlp.1} parent=5 // pred_check_branch
        %152 = sbr.rel (%p150) target = $region16
      $region15: #{llama_mlp.1} parent=5 // pred_region
        // Predicated region
        $region17: #{llama_mlp.1} parent=15 // pred_check
          %p153 = pneg %p50
        $region18: #{llama_mlp.1} parent=15 // pred_check_branch
          %155 = sbr.rel (%p153) target = $region20
        $region19: #{llama_mlp.1} parent=15 // pred_region
          %s156 = sand.u32 %s40, 1
          %s157 = scalar_lea.sflag [#allocation4], %s156
          %s158 = sand.u32 %s40, 1
          %s159 = smul.addr %s158, 128
          %s160 = scalar_lea.vmem [#allocation3], %s159
          %s161 = smul.u32 16, %s25
          %s163 = ssub.s32 2048, 2048
          %164 = vsyncadd %s157, %s163
          %s165 = smul.addr %s161, 2
          %s166 = smul.addr %s165, 64
          %s167 = scalar_lea.hbm %s0, %s166
          %s168 = sshll.u32 %s160, 4
          %s169 = int_to_ptr.vmem [resolvable:$true] %s168
          %174 = dma.hbm_to_vmem [thread:$0]  %s167, 2048, %s169, %s157, 128, 128, 8
        $region20: #{llama_mlp.1} parent=15 // pred_fallthru
          _
        // Predicated region
        $region21: #{llama_mlp.1} parent=15 // pred_check
          %p175 = pneg %p76
        $region22: #{llama_mlp.1} parent=15 // pred_check_branch
          %177 = sbr.rel (%p175) target = $region24
        $region23: #{llama_mlp.1} parent=15 // pred_region
          %s178 = sand.u32 %s18, 1
          %s179 = scalar_lea.sflag [#allocation7], %s178
          %s180 = sand.u32 %s66, 1
          %s181 = smul.addr %s180, 512
          %s182 = scalar_lea.vmem [#allocation6], %s181
          %s183 = smul.u32 4, %s26
          %s185 = ssub.s32 8192, 8192
          %186 = vsyncadd %s179, %s185
          %s187 = smul.addr %s183, 64
          %s188 = scalar_lea.hbm %s1, %s187
          %s189 = sshll.u32 %s182, 4
          %s190 = int_to_ptr.vmem [resolvable:$true] %s189
          %195 = dma.hbm_to_vmem [thread:$0]  %s188, 8192, %s190, %s179, 512, 256, 16
        $region24: #{llama_mlp.1} parent=15 // pred_fallthru
          _
        // Predicated region
        $region25: #{llama_mlp.1} parent=15 // pred_check
          %p196 = pneg %p102
        $region26: #{llama_mlp.1} parent=15 // pred_check_branch
          %198 = sbr.rel (%p196) target = $region28
        $region27: #{llama_mlp.1} parent=15 // pred_region
          %s199 = sand.u32 %s18, 1
          %s200 = scalar_lea.sflag [#allocation7], %s199
          %s201 = sand.u32 %s92, 1
          %s202 = smul.addr %s201, 256
          %s203 = scalar_lea.vmem [#allocation8], %s202
          %s204 = smul.u32 32, %s26
          %s206 = ssub.s32 4096, 4096
          %207 = vsyncadd %s200, %s206
          %s208 = smul.addr %s204, 2
          %s209 = smul.addr %s208, 64
          %s210 = scalar_lea.hbm %s2, %s209
          %s211 = sshll.u32 %s203, 4
          %s212 = int_to_ptr.vmem [resolvable:$true] %s211
          %217 = dma.hbm_to_vmem [thread:$0]  %s210, 4096, %s212, %s200, 128, 128, 8
        $region28: #{llama_mlp.1} parent=15 // pred_fallthru
          _
      $region16: #{llama_mlp.1} parent=5 // pred_fallthru
        _
      %p218 = scmp.le.s32.totalorder 1, %s18
      %p219 = scmp.lt.s32.totalorder %s18, 5
      %p220 = pnand %p218, %p219
      %p221 = pneg %p220
      // Predicated region
      $region29: #{llama_mlp.1} parent=5 // pred_check
        _
      $region30: #{llama_mlp.1} parent=5 // pred_check_branch
        %223 = sbr.rel (%p220) target = $region32
      $region31: #{llama_mlp.1} parent=5 // pred_region
        %s224 = ssub.s32 %s18, 1
        %s225 = sand.u32 %s43, 1
        %s226 = scalar_lea.sflag [#allocation4], %s225
        %s227 = sand.u32 %s43, 1
        %s228 = smul.addr %s227, 128
        %s229 = scalar_lea.vmem [#allocation3], %s228
        // Predicated region
        $region33: #{llama_mlp.1} parent=31 // pred_check
          %p230 = pneg %p56
        $region34: #{llama_mlp.1} parent=31 // pred_check_branch
          %232 = sbr.rel (%p230) target = $region36
        $region35: #{llama_mlp.1} parent=31 // pred_region
          %233 = dma.done %s226, 2048
        $region36: #{llama_mlp.1} parent=31 // pred_fallthru
          _
        %s234 = sand.u32 %s23, 1
        %s235 = scalar_lea.sflag [#allocation7], %s234
        %s236 = sand.u32 %s69, 1
        %s237 = smul.addr %s236, 512
        %s238 = scalar_lea.vmem [#allocation6], %s237
        // Predicated region
        $region37: #{llama_mlp.1} parent=31 // pred_check
          %p239 = pneg %p82
        $region38: #{llama_mlp.1} parent=31 // pred_check_branch
          %241 = sbr.rel (%p239) target = $region40
        $region39: #{llama_mlp.1} parent=31 // pred_region
          %242 = dma.done %s235, 8192
        $region40: #{llama_mlp.1} parent=31 // pred_fallthru
          _
        %s243 = sand.u32 %s23, 1
        %s244 = scalar_lea.sflag [#allocation7], %s243
        %s245 = sand.u32 %s95, 1
        %s246 = smul.addr %s245, 256
        %s247 = scalar_lea.vmem [#allocation8], %s246
        // Predicated region
        $region41: #{llama_mlp.1} parent=31 // pred_check
          %p248 = pneg %p108
        $region42: #{llama_mlp.1} parent=31 // pred_check_branch
          %250 = sbr.rel (%p248) target = $region44
        $region43: #{llama_mlp.1} parent=31 // pred_region
          %251 = dma.done %s244, 4096
        $region44: #{llama_mlp.1} parent=31 // pred_fallthru
          _
        %s252 = sand.u32 %s43, 1
        %s253 = scalar_lea.sflag [#allocation4], %s252
        %s254 = sand.u32 %s43, 1
        %s255 = smul.addr %s254, 128
        %s256 = scalar_lea.vmem [#allocation3], %s255
        %p257 = pneg %p56
        %p258 = pneg %p53
        %s259 = sand.u32 %s23, 1
        %s260 = scalar_lea.sflag [#allocation7], %s259
        %s261 = sand.u32 %s69, 1
        %s262 = smul.addr %s261, 512
        %s263 = scalar_lea.vmem [#allocation6], %s262
        %p264 = pneg %p82
        %p265 = pneg %p79
        %s266 = sand.u32 %s23, 1
        %s267 = scalar_lea.sflag [#allocation7], %s266
        %s268 = sand.u32 %s95, 1
        %s269 = smul.addr %s268, 256
        %s270 = scalar_lea.vmem [#allocation8], %s269
        %p271 = pneg %p108
        %p272 = pneg %p105
        %p273 = pneg %p134
        %p274 = pneg %p131
        %s275 = sand.u32 %s121, 1
        %s276 = scalar_lea.sflag [#allocation5], %s275
        %s277 = sand.u32 %s121, 1
        %s278 = smul.addr %s277, 128
        %s279 = scalar_lea.vmem [#allocation9], %s278
        %s280 = smul.u32 16, %s27
        %s281 = smul.u32 4, %s28
        %s282 = smul.u32 32, %s28
        %s283 = smul.u32 16, %s27
        %p284 = scmp.eq.s32.totalorder %s28, 0
        // Predicated region
        $region45: #{llama_mlp.1} parent=31 // pred_check
          %p285 = pneg %p284
        $region46: #{llama_mlp.1} parent=31 // pred_check_branch
          %287 = sbr.rel (%p285) target = $region48
        $region47: #{llama_mlp.1} parent=31 // pred_region
          %288 = vst [vmem:[#allocation2] sm:$0xff] 0.0
          %289 = vst [vmem:[#allocation2 + $0x8] sm:$0xff] 0.0
          %290 = vst [vmem:[#allocation2 + $0x10] sm:$0xff] 0.0
          %291 = vst [vmem:[#allocation2 + $0x18] sm:$0xff] 0.0
          %292 = vst [vmem:[#allocation2 + $0x20] sm:$0xff] 0.0
          %293 = vst [vmem:[#allocation2 + $0x28] sm:$0xff] 0.0
          %294 = vst [vmem:[#allocation2 + $0x30] sm:$0xff] 0.0
          %295 = vst [vmem:[#allocation2 + $0x38] sm:$0xff] 0.0
          %296 = vst [vmem:[#allocation2 + $0x40] sm:$0xff] 0.0
          %297 = vst [vmem:[#allocation2 + $0x48] sm:$0xff] 0.0
          %298 = vst [vmem:[#allocation2 + $0x50] sm:$0xff] 0.0
          %299 = vst [vmem:[#allocation2 + $0x58] sm:$0xff] 0.0
          %300 = vst [vmem:[#allocation2 + $0x60] sm:$0xff] 0.0
          %301 = vst [vmem:[#allocation2 + $0x68] sm:$0xff] 0.0
          %302 = vst [vmem:[#allocation2 + $0x70] sm:$0xff] 0.0
          %303 = vst [vmem:[#allocation2 + $0x78] sm:$0xff] 0.0
          %304 = vst [vmem:[#allocation2 + $0x80] sm:$0xff] 0.0
          %305 = vst [vmem:[#allocation2 + $0x88] sm:$0xff] 0.0
          %306 = vst [vmem:[#allocation2 + $0x90] sm:$0xff] 0.0
          %307 = vst [vmem:[#allocation2 + $0x98] sm:$0xff] 0.0
          %308 = vst [vmem:[#allocation2 + $0xa0] sm:$0xff] 0.0
          %309 = vst [vmem:[#allocation2 + $0xa8] sm:$0xff] 0.0
          %310 = vst [vmem:[#allocation2 + $0xb0] sm:$0xff] 0.0
          %311 = vst [vmem:[#allocation2 + $0xb8] sm:$0xff] 0.0
          %312 = vst [vmem:[#allocation2 + $0xc0] sm:$0xff] 0.0
          %313 = vst [vmem:[#allocation2 + $0xc8] sm:$0xff] 0.0
          %314 = vst [vmem:[#allocation2 + $0xd0] sm:$0xff] 0.0
          %315 = vst [vmem:[#allocation2 + $0xd8] sm:$0xff] 0.0
          %316 = vst [vmem:[#allocation2 + $0xe0] sm:$0xff] 0.0
          %317 = vst [vmem:[#allocation2 + $0xe8] sm:$0xff] 0.0
          %318 = vst [vmem:[#allocation2 + $0xf0] sm:$0xff] 0.0
          %319 = vst [vmem:[#allocation2 + $0xf8] sm:$0xff] 0.0
        $region48: #{llama_mlp.1} parent=31 // pred_fallthru
          _
        %v320 = vld [vmem:[%s229] sm:$0xff]
        %v321 = vld [vmem:[%s229 + $0x8] sm:$0xff]
        %v322 = vld [vmem:[%s229 + $0x10] sm:$0xff]
        %v323 = vld [vmem:[%s229 + $0x18] sm:$0xff]
        %v324 = vld [vmem:[%s229 + $0x20] sm:$0xff]
        %v325 = vld [vmem:[%s229 + $0x28] sm:$0xff]
        %v326 = vld [vmem:[%s229 + $0x30] sm:$0xff]
        %v327 = vld [vmem:[%s229 + $0x38] sm:$0xff]
        %v328 = vld [vmem:[%s238] sm:$0xff]
        %v329 = vld [vmem:[%s238 + $0x8] sm:$0xff]
        %v330 = vld [vmem:[%s238 + $0x10] sm:$0xff]
        %v331 = vld [vmem:[%s238 + $0x18] sm:$0xff]
        %v332 = vld [vmem:[%s238 + $0x20] sm:$0xff]
        %v333 = vld [vmem:[%s238 + $0x28] sm:$0xff]
        %v334 = vld [vmem:[%s238 + $0x30] sm:$0xff]
        %v335 = vld [vmem:[%s238 + $0x38] sm:$0xff]
        %v336 = vld [vmem:[%s238 + $0x40] sm:$0xff]
        %v337 = vld [vmem:[%s238 + $0x48] sm:$0xff]
        %v338 = vld [vmem:[%s238 + $0x50] sm:$0xff]
        %v339 = vld [vmem:[%s238 + $0x58] sm:$0xff]
        %v340 = vld [vmem:[%s238 + $0x60] sm:$0xff]
        %v341 = vld [vmem:[%s238 + $0x68] sm:$0xff]
        %v342 = vld [vmem:[%s238 + $0x70] sm:$0xff]
        %v343 = vld [vmem:[%s238 + $0x78] sm:$0xff]
        %v344 = vld [vmem:[%s238 + $0x80] sm:$0xff]
        %v345 = vld [vmem:[%s238 + $0x88] sm:$0xff]
        %v346 = vld [vmem:[%s238 + $0x90] sm:$0xff]
        %v347 = vld [vmem:[%s238 + $0x98] sm:$0xff]
        %v348 = vld [vmem:[%s238 + $0xa0] sm:$0xff]
        %v349 = vld [vmem:[%s238 + $0xa8] sm:$0xff]
        %v350 = vld [vmem:[%s238 + $0xb0] sm:$0xff]
        %v351 = vld [vmem:[%s238 + $0xb8] sm:$0xff]
        %v352 = vld [vmem:[%s238 + $0xc0] sm:$0xff]
        %v353 = vld [vmem:[%s238 + $0xc8] sm:$0xff]
        %v354 = vld [vmem:[%s238 + $0xd0] sm:$0xff]
        %v355 = vld [vmem:[%s238 + $0xd8] sm:$0xff]
        %v356 = vld [vmem:[%s238 + $0xe0] sm:$0xff]
        %v357 = vld [vmem:[%s238 + $0xe8] sm:$0xff]
        %v358 = vld [vmem:[%s238 + $0xf0] sm:$0xff]
        %v359 = vld [vmem:[%s238 + $0xf8] sm:$0xff]
        %v360 = vld [vmem:[%s238 + $0x100] sm:$0xff]
        %v361 = vld [vmem:[%s238 + $0x108] sm:$0xff]
        %v362 = vld [vmem:[%s238 + $0x110] sm:$0xff]
        %v363 = vld [vmem:[%s238 + $0x118] sm:$0xff]
        %v364 = vld [vmem:[%s238 + $0x120] sm:$0xff]
        %v365 = vld [vmem:[%s238 + $0x128] sm:$0xff]
        %v366 = vld [vmem:[%s238 + $0x130] sm:$0xff]
        %v367 = vld [vmem:[%s238 + $0x138] sm:$0xff]
        %v368 = vld [vmem:[%s238 + $0x140] sm:$0xff]
        %v369 = vld [vmem:[%s238 + $0x148] sm:$0xff]
        %v370 = vld [vmem:[%s238 + $0x150] sm:$0xff]
        %v371 = vld [vmem:[%s238 + $0x158] sm:$0xff]
        %v372 = vld [vmem:[%s238 + $0x160] sm:$0xff]
        %v373 = vld [vmem:[%s238 + $0x168] sm:$0xff]
        %v374 = vld [vmem:[%s238 + $0x170] sm:$0xff]
        %v375 = vld [vmem:[%s238 + $0x178] sm:$0xff]
        %v376 = vld [vmem:[%s238 + $0x180] sm:$0xff]
        %v377 = vld [vmem:[%s238 + $0x188] sm:$0xff]
        %v378 = vld [vmem:[%s238 + $0x190] sm:$0xff]
        %v379 = vld [vmem:[%s238 + $0x198] sm:$0xff]
        %v380 = vld [vmem:[%s238 + $0x1a0] sm:$0xff]
        %v381 = vld [vmem:[%s238 + $0x1a8] sm:$0xff]
        %v382 = vld [vmem:[%s238 + $0x1b0] sm:$0xff]
        %v383 = vld [vmem:[%s238 + $0x1b8] sm:$0xff]
        %v384 = vld [vmem:[%s238 + $0x1c0] sm:$0xff]
        %v385 = vld [vmem:[%s238 + $0x1c8] sm:$0xff]
        %v386 = vld [vmem:[%s238 + $0x1d0] sm:$0xff]
        %v387 = vld [vmem:[%s238 + $0x1d8] sm:$0xff]
        %v388 = vld [vmem:[%s238 + $0x1e0] sm:$0xff]
        %v389 = vld [vmem:[%s238 + $0x1e8] sm:$0xff]
        %v390 = vld [vmem:[%s238 + $0x1f0] sm:$0xff]
        %v391 = vld [vmem:[%s238 + $0x1f8] sm:$0xff]
        %v400 = vunpack.c.l.b16 %v320
        %v401 = vunpack.c.h.b16 %v320
        %v402 = vunpack.c.l.b16 %v321
        %v403 = vunpack.c.h.b16 %v321
        %v404 = vunpack.c.l.b16 %v322
        %v405 = vunpack.c.h.b16 %v322
        %v406 = vunpack.c.l.b16 %v323
        %v407 = vunpack.c.h.b16 %v323
        %v408 = vunpack.c.l.b16 %v324
        %v409 = vunpack.c.h.b16 %v324
        %v410 = vunpack.c.l.b16 %v325
        %v411 = vunpack.c.h.b16 %v325
        %v412 = vunpack.c.l.b16 %v326
        %v413 = vunpack.c.h.b16 %v326
        %v414 = vunpack.c.l.b16 %v327
        %v415 = vunpack.c.h.b16 %v327
        %v416 = vpack.c.b16 %v402, %v400
        %v417 = vpack.c.b16 %v403, %v401
        %v418 = vpack.c.b16 %v406, %v404
        %v419 = vpack.c.b16 %v407, %v405
        %v420 = vpack.c.b16 %v410, %v408
        %v421 = vpack.c.b16 %v411, %v409
        %v422 = vpack.c.b16 %v414, %v412
        %v423 = vpack.c.b16 %v415, %v413
        %v496 = vunpack.c.l.b16 %v328
        %v497 = vunpack.c.h.b16 %v328
        %v498 = vunpack.c.l.b16 %v329
        %v499 = vunpack.c.h.b16 %v329
        %v500 = vunpack.c.l.b16 %v330
        %v501 = vunpack.c.h.b16 %v330
        %v502 = vunpack.c.l.b16 %v331
        %v503 = vunpack.c.h.b16 %v331
        %v504 = vunpack.c.l.b16 %v332
        %v505 = vunpack.c.h.b16 %v332
        %v506 = vunpack.c.l.b16 %v333
        %v507 = vunpack.c.h.b16 %v333
        %v508 = vunpack.c.l.b16 %v334
        %v509 = vunpack.c.h.b16 %v334
        %v510 = vunpack.c.l.b16 %v335
        %v511 = vunpack.c.h.b16 %v335
        %v512 = vunpack.c.l.b16 %v336
        %v513 = vunpack.c.h.b16 %v336
        %v514 = vunpack.c.l.b16 %v337
        %v515 = vunpack.c.h.b16 %v337
        %v516 = vunpack.c.l.b16 %v338
        %v517 = vunpack.c.h.b16 %v338
        %v518 = vunpack.c.l.b16 %v339
        %v519 = vunpack.c.h.b16 %v339
        %v520 = vunpack.c.l.b16 %v340
        %v521 = vunpack.c.h.b16 %v340
        %v522 = vunpack.c.l.b16 %v341
        %v523 = vunpack.c.h.b16 %v341
        %v524 = vunpack.c.l.b16 %v342
        %v525 = vunpack.c.h.b16 %v342
        %v526 = vunpack.c.l.b16 %v343
        %v527 = vunpack.c.h.b16 %v343
        %v528 = vunpack.c.l.b16 %v344
        %v529 = vunpack.c.h.b16 %v344
        %v530 = vunpack.c.l.b16 %v345
        %v531 = vunpack.c.h.b16 %v345
        %v532 = vunpack.c.l.b16 %v346
        %v533 = vunpack.c.h.b16 %v346
        %v534 = vunpack.c.l.b16 %v347
        %v535 = vunpack.c.h.b16 %v347
        %v536 = vunpack.c.l.b16 %v348
        %v537 = vunpack.c.h.b16 %v348
        %v538 = vunpack.c.l.b16 %v349
        %v539 = vunpack.c.h.b16 %v349
        %v540 = vunpack.c.l.b16 %v350
        %v541 = vunpack.c.h.b16 %v350
        %v542 = vunpack.c.l.b16 %v351
        %v543 = vunpack.c.h.b16 %v351
        %v544 = vunpack.c.l.b16 %v352
        %v545 = vunpack.c.h.b16 %v352
        %v546 = vunpack.c.l.b16 %v353
        %v547 = vunpack.c.h.b16 %v353
        %v548 = vunpack.c.l.b16 %v354
        %v549 = vunpack.c.h.b16 %v354
        %v550 = vunpack.c.l.b16 %v355
        %v551 = vunpack.c.h.b16 %v355
        %v552 = vunpack.c.l.b16 %v356
        %v553 = vunpack.c.h.b16 %v356
        %v554 = vunpack.c.l.b16 %v357
        %v555 = vunpack.c.h.b16 %v357
        %v556 = vunpack.c.l.b16 %v358
        %v557 = vunpack.c.h.b16 %v358
        %v558 = vunpack.c.l.b16 %v359
        %v559 = vunpack.c.h.b16 %v359
        %v560 = vunpack.c.l.b16 %v360
        %v561 = vunpack.c.h.b16 %v360
        %v562 = vunpack.c.l.b16 %v361
        %v563 = vunpack.c.h.b16 %v361
        %v564 = vunpack.c.l.b16 %v362
        %v565 = vunpack.c.h.b16 %v362
        %v566 = vunpack.c.l.b16 %v363
        %v567 = vunpack.c.h.b16 %v363
        %v568 = vunpack.c.l.b16 %v364
        %v569 = vunpack.c.h.b16 %v364
        %v570 = vunpack.c.l.b16 %v365
        %v571 = vunpack.c.h.b16 %v365
        %v572 = vunpack.c.l.b16 %v366
        %v573 = vunpack.c.h.b16 %v366
        %v574 = vunpack.c.l.b16 %v367
        %v575 = vunpack.c.h.b16 %v367
        %v576 = vunpack.c.l.b16 %v368
        %v577 = vunpack.c.h.b16 %v368
        %v578 = vunpack.c.l.b16 %v369
        %v579 = vunpack.c.h.b16 %v369
        %v580 = vunpack.c.l.b16 %v370
        %v581 = vunpack.c.h.b16 %v370
        %v582 = vunpack.c.l.b16 %v371
        %v583 = vunpack.c.h.b16 %v371
        %v584 = vunpack.c.l.b16 %v372
        %v585 = vunpack.c.h.b16 %v372
        %v586 = vunpack.c.l.b16 %v373
        %v587 = vunpack.c.h.b16 %v373
        %v588 = vunpack.c.l.b16 %v374
        %v589 = vunpack.c.h.b16 %v374
        %v590 = vunpack.c.l.b16 %v375
        %v591 = vunpack.c.h.b16 %v375
        %v592 = vunpack.c.l.b16 %v376
        %v593 = vunpack.c.h.b16 %v376
        %v594 = vunpack.c.l.b16 %v377
        %v595 = vunpack.c.h.b16 %v377
        %v596 = vunpack.c.l.b16 %v378
        %v597 = vunpack.c.h.b16 %v378
        %v598 = vunpack.c.l.b16 %v379
        %v599 = vunpack.c.h.b16 %v379
        %v600 = vunpack.c.l.b16 %v380
        %v601 = vunpack.c.h.b16 %v380
        %v602 = vunpack.c.l.b16 %v381
        %v603 = vunpack.c.h.b16 %v381
        %v604 = vunpack.c.l.b16 %v382
        %v605 = vunpack.c.h.b16 %v382
        %v606 = vunpack.c.l.b16 %v383
        %v607 = vunpack.c.h.b16 %v383
        %v608 = vunpack.c.l.b16 %v384
        %v609 = vunpack.c.h.b16 %v384
        %v610 = vunpack.c.l.b16 %v385
        %v611 = vunpack.c.h.b16 %v385
        %v612 = vunpack.c.l.b16 %v386
        %v613 = vunpack.c.h.b16 %v386
        %v614 = vunpack.c.l.b16 %v387
        %v615 = vunpack.c.h.b16 %v387
        %v616 = vunpack.c.l.b16 %v388
        %v617 = vunpack.c.h.b16 %v388
        %v618 = vunpack.c.l.b16 %v389
        %v619 = vunpack.c.h.b16 %v389
        %v620 = vunpack.c.l.b16 %v390
        %v621 = vunpack.c.h.b16 %v390
        %v622 = vunpack.c.l.b16 %v391
        %v623 = vunpack.c.h.b16 %v391
        %v624 = vpack.c.b16 %v500, %v496
        %v625 = vpack.c.b16 %v501, %v497
        %v626 = vpack.c.b16 %v502, %v498
        %v627 = vpack.c.b16 %v503, %v499
        %v628 = vpack.c.b16 %v508, %v504
        %v629 = vpack.c.b16 %v509, %v505
        %v630 = vpack.c.b16 %v510, %v506
        %v631 = vpack.c.b16 %v511, %v507
        %v632 = vpack.c.b16 %v516, %v512
        %v633 = vpack.c.b16 %v517, %v513
        %v634 = vpack.c.b16 %v518, %v514
        %v635 = vpack.c.b16 %v519, %v515
        %v636 = vpack.c.b16 %v524, %v520
        %v637 = vpack.c.b16 %v525, %v521
        %v638 = vpack.c.b16 %v526, %v522
        %v639 = vpack.c.b16 %v527, %v523
        %v640 = vpack.c.b16 %v532, %v528
        %v641 = vpack.c.b16 %v533, %v529
        %v642 = vpack.c.b16 %v534, %v530
        %v643 = vpack.c.b16 %v535, %v531
        %v644 = vpack.c.b16 %v540, %v536
        %v645 = vpack.c.b16 %v541, %v537
        %v646 = vpack.c.b16 %v542, %v538
        %v647 = vpack.c.b16 %v543, %v539
        %v648 = vpack.c.b16 %v548, %v544
        %v649 = vpack.c.b16 %v549, %v545
        %v650 = vpack.c.b16 %v550, %v546
        %v651 = vpack.c.b16 %v551, %v547
        %v652 = vpack.c.b16 %v556, %v552
        %v653 = vpack.c.b16 %v557, %v553
        %v654 = vpack.c.b16 %v558, %v554
        %v655 = vpack.c.b16 %v559, %v555
        %v656 = vpack.c.b16 %v564, %v560
        %v657 = vpack.c.b16 %v565, %v561
        %v658 = vpack.c.b16 %v566, %v562
        %v659 = vpack.c.b16 %v567, %v563
        %v660 = vpack.c.b16 %v572, %v568
        %v661 = vpack.c.b16 %v573, %v569
        %v662 = vpack.c.b16 %v574, %v570
        %v663 = vpack.c.b16 %v575, %v571
        %v664 = vpack.c.b16 %v580, %v576
        %v665 = vpack.c.b16 %v581, %v577
        %v666 = vpack.c.b16 %v582, %v578
        %v667 = vpack.c.b16 %v583, %v579
        %v668 = vpack.c.b16 %v588, %v584
        %v669 = vpack.c.b16 %v589, %v585
        %v670 = vpack.c.b16 %v590, %v586
        %v671 = vpack.c.b16 %v591, %v587
        %v672 = vpack.c.b16 %v596, %v592
        %v673 = vpack.c.b16 %v597, %v593
        %v674 = vpack.c.b16 %v598, %v594
        %v675 = vpack.c.b16 %v599, %v595
        %v676 = vpack.c.b16 %v604, %v600
        %v677 = vpack.c.b16 %v605, %v601
        %v678 = vpack.c.b16 %v606, %v602
        %v679 = vpack.c.b16 %v607, %v603
        %v680 = vpack.c.b16 %v612, %v608
        %v681 = vpack.c.b16 %v613, %v609
        %v682 = vpack.c.b16 %v614, %v610
        %v683 = vpack.c.b16 %v615, %v611
        %v684 = vpack.c.b16 %v620, %v616
        %v685 = vpack.c.b16 %v621, %v617
        %v686 = vpack.c.b16 %v622, %v618
        %v687 = vpack.c.b16 %v623, %v619
        %752 = vmatprep.subr.bf16.mxu0 %v625
        %753 = vmatpush1.bf16.msra.mxu0 %v624
        %754 = vmatprep.subr.bf16.mxu0 %v629
        %755 = vmatpush1.bf16.msra.mxu0 %v628
        %756 = vmatprep.subr.bf16.mxu0 %v633
        %757 = vmatpush1.bf16.msra.mxu0 %v632
        %758 = vmatprep.subr.bf16.mxu0 %v637
        %759 = vmatpush1.bf16.msra.mxu0 %v636
        %760 = vmatprep.subr.bf16.mxu0 %v641
        %761 = vmatpush1.bf16.msra.mxu0 %v640
        %762 = vmatprep.subr.bf16.mxu0 %v645
        %763 = vmatpush1.bf16.msra.mxu0 %v644
        %764 = vmatprep.subr.bf16.mxu0 %v649
        %765 = vmatpush1.bf16.msra.mxu0 %v648
        %766 = vmatprep.subr.bf16.mxu0 %v653
        %767 = vmatpush1.bf16.msra.mxu0 %v652
        %768 = vmatprep.subr.bf16.mxu0 %v657
        %769 = vmatpush1.bf16.msra.mxu0 %v656
        %770 = vmatprep.subr.bf16.mxu0 %v661
        %771 = vmatpush1.bf16.msra.mxu0 %v660
        %772 = vmatprep.subr.bf16.mxu0 %v665
        %773 = vmatpush1.bf16.msra.mxu0 %v664
        %774 = vmatprep.subr.bf16.mxu0 %v669
        %775 = vmatpush1.bf16.msra.mxu0 %v668
        %776 = vmatprep.subr.bf16.mxu0 %v673
        %777 = vmatpush1.bf16.msra.mxu0 %v672
        %778 = vmatprep.subr.bf16.mxu0 %v677
        %779 = vmatpush1.bf16.msra.mxu0 %v676
        %780 = vmatprep.subr.bf16.mxu0 %v681
        %781 = vmatpush1.bf16.msra.mxu0 %v680
        %782 = vmatprep.subr.bf16.mxu0 %v685
        %783 = vmatpush1.bf16.msra.mxu0 %v684
        %784 = vmatprep.mubr.bf16.mxu0 %v417
        %785 = vmatmul.mubr.bf16.gmra.mrb[0].mxu0 %v416
        %v786 = vpop.f32.mrb[0].mxu0
        %v787 = vadd.f32 0.0, %v786
        %v788 = vpop.f32.mrb[0].mxu0
        %v789 = vadd.f32 0.0, %v788
        %v790 = vpop.f32.mrb[0].mxu0
        %v791 = vadd.f32 0.0, %v790
        %v792 = vpop.f32.mrb[0].mxu0
        %v793 = vadd.f32 0.0, %v792
        %794 = vmatprep.mubr.bf16.mxu0 %v419
        %795 = vmatmul.mubr.bf16.gmra.mrb[0].mxu0 %v418
        %v796 = vpop.f32.mrb[0].mxu0
        %v797 = vadd.f32 0.0, %v796
        %v798 = vpop.f32.mrb[0].mxu0
        %v799 = vadd.f32 0.0, %v798
        %v800 = vpop.f32.mrb[0].mxu0
        %v801 = vadd.f32 0.0, %v800
        %v802 = vpop.f32.mrb[0].mxu0
        %v803 = vadd.f32 0.0, %v802
        %804 = vmatprep.mubr.bf16.mxu0 %v421
        %805 = vmatmul.mubr.bf16.gmra.mrb[0].mxu0 %v420
        %v806 = vpop.f32.mrb[0].mxu0
        %v807 = vadd.f32 0.0, %v806
        %v808 = vpop.f32.mrb[0].mxu0
        %v809 = vadd.f32 0.0, %v808
        %v810 = vpop.f32.mrb[0].mxu0
        %v811 = vadd.f32 0.0, %v810
        %v812 = vpop.f32.mrb[0].mxu0
        %v813 = vadd.f32 0.0, %v812
        %814 = vmatprep.mubr.bf16.mxu0 %v423
        %815 = vmatmul.mubr.bf16.gmra.mrb[0].mxu0 %v422
        %v816 = vpop.f32.mrb[0].mxu0
        %v817 = vadd.f32 0.0, %v816
        %v818 = vpop.f32.mrb[0].mxu0
        %v819 = vadd.f32 0.0, %v818
        %v820 = vpop.f32.mrb[0].mxu0
        %v821 = vadd.f32 0.0, %v820
        %v822 = vpop.f32.mrb[0].mxu0
        %v823 = vadd.f32 0.0, %v822
        %824 = vdwg.mxu0
        %825 = vmatprep.subr.bf16.mxu0 %v627
        %826 = vmatpush1.bf16.msra.mxu0 %v626
        %827 = vmatprep.subr.bf16.mxu0 %v631
        %828 = vmatpush1.bf16.msra.mxu0 %v630
        %829 = vmatprep.subr.bf16.mxu0 %v635
        %830 = vmatpush1.bf16.msra.mxu0 %v634
        %831 = vmatprep.subr.bf16.mxu0 %v639
        %832 = vmatpush1.bf16.msra.mxu0 %v638
        %833 = vmatprep.subr.bf16.mxu0 %v643
        %834 = vmatpush1.bf16.msra.mxu0 %v642
        %835 = vmatprep.subr.bf16.mxu0 %v647
        %836 = vmatpush1.bf16.msra.mxu0 %v646
        %837 = vmatprep.subr.bf16.mxu0 %v651
        %838 = vmatpush1.bf16.msra.mxu0 %v650
        %839 = vmatprep.subr.bf16.mxu0 %v655
        %840 = vmatpush1.bf16.msra.mxu0 %v654
        %841 = vmatprep.subr.bf16.mxu0 %v659
        %842 = vmatpush1.bf16.msra.mxu0 %v658
        %843 = vmatprep.subr.bf16.mxu0 %v663
        %844 = vmatpush1.bf16.msra.mxu0 %v662
        %845 = vmatprep.subr.bf16.mxu0 %v667
        %846 = vmatpush1.bf16.msra.mxu0 %v666
        %847 = vmatprep.subr.bf16.mxu0 %v671
        %848 = vmatpush1.bf16.msra.mxu0 %v670
        %849 = vmatprep.subr.bf16.mxu0 %v675
        %850 = vmatpush1.bf16.msra.mxu0 %v674
        %851 = vmatprep.subr.bf16.mxu0 %v679
        %852 = vmatpush1.bf16.msra.mxu0 %v678
        %853 = vmatprep.subr.bf16.mxu0 %v683
        %854 = vmatpush1.bf16.msra.mxu0 %v682
        %855 = vmatprep.subr.bf16.mxu0 %v687
        %856 = vmatpush1.bf16.msra.mxu0 %v686
        %857 = vmatprep.mubr.bf16.mxu0 %v417
        %858 = vmatmul.mubr.bf16.gmra.mrb[0].mxu0 %v416
        %v859 = vpop.f32.mrb[0].mxu0
        %v860 = vadd.f32 0.0, %v859
        %v861 = vpop.f32.mrb[0].mxu0
        %v862 = vadd.f32 0.0, %v861
        %v863 = vpop.f32.mrb[0].mxu0
        %v864 = vadd.f32 0.0, %v863
        %v865 = vpop.f32.mrb[0].mxu0
        %v866 = vadd.f32 0.0, %v865
        %867 = vmatprep.mubr.bf16.mxu0 %v419
        %868 = vmatmul.mubr.bf16.gmra.mrb[0].mxu0 %v418
        %v869 = vpop.f32.mrb[0].mxu0
        %v870 = vadd.f32 0.0, %v869
        %v871 = vpop.f32.mrb[0].mxu0
        %v872 = vadd.f32 0.0, %v871
        %v873 = vpop.f32.mrb[0].mxu0
        %v874 = vadd.f32 0.0, %v873
        %v875 = vpop.f32.mrb[0].mxu0
        %v876 = vadd.f32 0.0, %v875
        %877 = vmatprep.mubr.bf16.mxu0 %v421
        %878 = vmatmul.mubr.bf16.gmra.mrb[0].mxu0 %v420
        %v879 = vpop.f32.mrb[0].mxu0
        %v880 = vadd.f32 0.0, %v879
        %v881 = vpop.f32.mrb[0].mxu0
        %v882 = vadd.f32 0.0, %v881
        %v883 = vpop.f32.mrb[0].mxu0
        %v884 = vadd.f32 0.0, %v883
        %v885 = vpop.f32.mrb[0].mxu0
        %v886 = vadd.f32 0.0, %v885
        %887 = vmatprep.mubr.bf16.mxu0 %v423
        %888 = vmatmul.mubr.bf16.gmra.mrb[0].mxu0 %v422
        %v889 = vpop.f32.mrb[0].mxu0
        %v890 = vadd.f32 0.0, %v889
        %v891 = vpop.f32.mrb[0].mxu0
        %v892 = vadd.f32 0.0, %v891
        %v893 = vpop.f32.mrb[0].mxu0
        %v894 = vadd.f32 0.0, %v893
        %v895 = vpop.f32.mrb[0].mxu0
        %v896 = vadd.f32 0.0, %v895
        %897 = vdwg.mxu0
        %v898 = vxor.u32 %v787, 2147483648
        %v899 = vxor.u32 %v789, 2147483648
        %v900 = vxor.u32 %v791, 2147483648
        %v901 = vxor.u32 %v793, 2147483648
        %v902 = vxor.u32 %v797, 2147483648
        %v903 = vxor.u32 %v799, 2147483648
        %v904 = vxor.u32 %v801, 2147483648
        %v905 = vxor.u32 %v803, 2147483648
        %v906 = vxor.u32 %v807, 2147483648
        %v907 = vxor.u32 %v809, 2147483648
        %v908 = vxor.u32 %v811, 2147483648
        %v909 = vxor.u32 %v813, 2147483648
        %v910 = vxor.u32 %v817, 2147483648
        %v911 = vxor.u32 %v819, 2147483648
        %v912 = vxor.u32 %v821, 2147483648
        %v913 = vxor.u32 %v823, 2147483648
        %v914 = vmul.f32 %v898, 1.442695
        %v915 = vpow.pop %v914
        %v916 = vmul.f32 %v899, 1.442695
        %v917 = vpow.pop %v916
        %v918 = vmul.f32 %v900, 1.442695
        %v919 = vpow.pop %v918
        %v920 = vmul.f32 %v901, 1.442695
        %v921 = vpow.pop %v920
        %v922 = vmul.f32 %v902, 1.442695
        %v923 = vpow.pop %v922
        %v924 = vmul.f32 %v903, 1.442695
        %v925 = vpow.pop %v924
        %v926 = vmul.f32 %v904, 1.442695
        %v927 = vpow.pop %v926
        %v928 = vmul.f32 %v905, 1.442695
        %v929 = vpow.pop %v928
        %v930 = vmul.f32 %v906, 1.442695
        %v931 = vpow.pop %v930
        %v932 = vmul.f32 %v907, 1.442695
        %v933 = vpow.pop %v932
        %v934 = vmul.f32 %v908, 1.442695
        %v935 = vpow.pop %v934
        %v936 = vmul.f32 %v909, 1.442695
        %v937 = vpow.pop %v936
        %v938 = vmul.f32 %v910, 1.442695
        %v939 = vpow.pop %v938
        %v940 = vmul.f32 %v911, 1.442695
        %v941 = vpow.pop %v940
        %v942 = vmul.f32 %v912, 1.442695
        %v943 = vpow.pop %v942
        %v944 = vmul.f32 %v913, 1.442695
        %v945 = vpow.pop %v944
        %v946 = vadd.f32 %v915, 1.0
        %v947 = vadd.f32 %v917, 1.0
        %v948 = vadd.f32 %v919, 1.0
        %v949 = vadd.f32 %v921, 1.0
        %v950 = vadd.f32 %v923, 1.0
        %v951 = vadd.f32 %v925, 1.0
        %v952 = vadd.f32 %v927, 1.0
        %v953 = vadd.f32 %v929, 1.0
        %v954 = vadd.f32 %v931, 1.0
        %v955 = vadd.f32 %v933, 1.0
        %v956 = vadd.f32 %v935, 1.0
        %v957 = vadd.f32 %v937, 1.0
        %v958 = vadd.f32 %v939, 1.0
        %v959 = vadd.f32 %v941, 1.0
        %v960 = vadd.f32 %v943, 1.0
        %v961 = vadd.f32 %v945, 1.0
        %v962 = vrcp.pop %v946
        %v963 = vmul.f32 1.0, %v962
        %v964 = vrcp.pop %v947
        %v965 = vmul.f32 1.0, %v964
        %v966 = vrcp.pop %v948
        %v967 = vmul.f32 1.0, %v966
        %v968 = vrcp.pop %v949
        %v969 = vmul.f32 1.0, %v968
        %v970 = vrcp.pop %v950
        %v971 = vmul.f32 1.0, %v970
        %v972 = vrcp.pop %v951
        %v973 = vmul.f32 1.0, %v972
        %v974 = vrcp.pop %v952
        %v975 = vmul.f32 1.0, %v974
        %v976 = vrcp.pop %v953
        %v977 = vmul.f32 1.0, %v976
        %v978 = vrcp.pop %v954
        %v979 = vmul.f32 1.0, %v978
        %v980 = vrcp.pop %v955
        %v981 = vmul.f32 1.0, %v980
        %v982 = vrcp.pop %v956
        %v983 = vmul.f32 1.0, %v982
        %v984 = vrcp.pop %v957
        %v985 = vmul.f32 1.0, %v984
        %v986 = vrcp.pop %v958
        %v987 = vmul.f32 1.0, %v986
        %v988 = vrcp.pop %v959
        %v989 = vmul.f32 1.0, %v988
        %v990 = vrcp.pop %v960
        %v991 = vmul.f32 1.0, %v990
        %v992 = vrcp.pop %v961
        %v993 = vmul.f32 1.0, %v992
        %v994 = vmul.f32 %v787, %v963
        %v995 = vmul.f32 %v789, %v965
        %v996 = vmul.f32 %v791, %v967
        %v997 = vmul.f32 %v793, %v969
        %v998 = vmul.f32 %v797, %v971
        %v999 = vmul.f32 %v799, %v973
        %v1000 = vmul.f32 %v801, %v975
        %v1001 = vmul.f32 %v803, %v977
        %v1002 = vmul.f32 %v807, %v979
        %v1003 = vmul.f32 %v809, %v981
        %v1004 = vmul.f32 %v811, %v983
        %v1005 = vmul.f32 %v813, %v985
        %v1006 = vmul.f32 %v817, %v987
        %v1007 = vmul.f32 %v819, %v989
        %v1008 = vmul.f32 %v821, %v991
        %v1009 = vmul.f32 %v823, %v993
        %v1010 = vmul.f32 %v994, %v860
        %v1011 = vmul.f32 %v995, %v862
        %v1012 = vmul.f32 %v996, %v864
        %v1013 = vmul.f32 %v997, %v866
        %v1014 = vmul.f32 %v998, %v870
        %v1015 = vmul.f32 %v999, %v872
        %v1016 = vmul.f32 %v1000, %v874
        %v1017 = vmul.f32 %v1001, %v876
        %v1018 = vmul.f32 %v1002, %v880
        %v1019 = vmul.f32 %v1003, %v882
        %v1020 = vmul.f32 %v1004, %v884
        %v1021 = vmul.f32 %v1005, %v886
        %v1022 = vmul.f32 %v1006, %v890
        %v1023 = vmul.f32 %v1007, %v892
        %v1024 = vmul.f32 %v1008, %v894
        %v1025 = vmul.f32 %v1009, %v896
        %v1026 = vld [vmem:[#allocation2] sm:$0xff]
        %v1027 = vld [vmem:[#allocation2 + $0x8] sm:$0xff]
        %v1028 = vld [vmem:[#allocation2 + $0x10] sm:$0xff]
        %v1029 = vld [vmem:[#allocation2 + $0x18] sm:$0xff]
        %v1030 = vld [vmem:[#allocation2 + $0x20] sm:$0xff]
        %v1031 = vld [vmem:[#allocation2 + $0x28] sm:$0xff]
        %v1032 = vld [vmem:[#allocation2 + $0x30] sm:$0xff]
        %v1033 = vld [vmem:[#allocation2 + $0x38] sm:$0xff]
        %v1034 = vld [vmem:[#allocation2 + $0x40] sm:$0xff]
        %v1035 = vld [vmem:[#allocation2 + $0x48] sm:$0xff]
        %v1036 = vld [vmem:[#allocation2 + $0x50] sm:$0xff]
        %v1037 = vld [vmem:[#allocation2 + $0x58] sm:$0xff]
        %v1038 = vld [vmem:[#allocation2 + $0x60] sm:$0xff]
        %v1039 = vld [vmem:[#allocation2 + $0x68] sm:$0xff]
        %v1040 = vld [vmem:[#allocation2 + $0x70] sm:$0xff]
        %v1041 = vld [vmem:[#allocation2 + $0x78] sm:$0xff]
        %v1042 = vpack.c.bf16 %v1012, %v1010
        %v1043 = vpack.c.bf16 %v1013, %v1011
        %v1044 = vpack.c.bf16 %v1016, %v1014
        %v1045 = vpack.c.bf16 %v1017, %v1015
        %v1046 = vpack.c.bf16 %v1020, %v1018
        %v1047 = vpack.c.bf16 %v1021, %v1019
        %v1048 = vpack.c.bf16 %v1024, %v1022
        %v1049 = vpack.c.bf16 %v1025, %v1023
        %v1050 = vld [vmem:[%s247] sm:$0xff]
        %v1051 = vld [vmem:[%s247 + $0x8] sm:$0xff]
        %v1052 = vld [vmem:[%s247 + $0x10] sm:$0xff]
        %v1053 = vld [vmem:[%s247 + $0x18] sm:$0xff]
        %v1054 = vld [vmem:[%s247 + $0x20] sm:$0xff]
        %v1055 = vld [vmem:[%s247 + $0x28] sm:$0xff]
        %v1056 = vld [vmem:[%s247 + $0x30] sm:$0xff]
        %v1057 = vld [vmem:[%s247 + $0x38] sm:$0xff]
        %v1058 = vld [vmem:[%s247 + $0x40] sm:$0xff]
        %v1059 = vld [vmem:[%s247 + $0x48] sm:$0xff]
        %v1060 = vld [vmem:[%s247 + $0x50] sm:$0xff]
        %v1061 = vld [vmem:[%s247 + $0x58] sm:$0xff]
        %v1062 = vld [vmem:[%s247 + $0x60] sm:$0xff]
        %v1063 = vld [vmem:[%s247 + $0x68] sm:$0xff]
        %v1064 = vld [vmem:[%s247 + $0x70] sm:$0xff]
        %v1065 = vld [vmem:[%s247 + $0x78] sm:$0xff]
        %v1066 = vld [vmem:[%s247 + $0x80] sm:$0xff]
        %v1067 = vld [vmem:[%s247 + $0x88] sm:$0xff]
        %v1068 = vld [vmem:[%s247 + $0x90] sm:$0xff]
        %v1069 = vld [vmem:[%s247 + $0x98] sm:$0xff]
        %v1070 = vld [vmem:[%s247 + $0xa0] sm:$0xff]
        %v1071 = vld [vmem:[%s247 + $0xa8] sm:$0xff]
        %v1072 = vld [vmem:[%s247 + $0xb0] sm:$0xff]
        %v1073 = vld [vmem:[%s247 + $0xb8] sm:$0xff]
        %v1074 = vld [vmem:[%s247 + $0xc0] sm:$0xff]
        %v1075 = vld [vmem:[%s247 + $0xc8] sm:$0xff]
        %v1076 = vld [vmem:[%s247 + $0xd0] sm:$0xff]
        %v1077 = vld [vmem:[%s247 + $0xd8] sm:$0xff]
        %v1078 = vld [vmem:[%s247 + $0xe0] sm:$0xff]
        %v1079 = vld [vmem:[%s247 + $0xe8] sm:$0xff]
        %v1080 = vld [vmem:[%s247 + $0xf0] sm:$0xff]
        %v1081 = vld [vmem:[%s247 + $0xf8] sm:$0xff]
        %v1114 = vunpack.c.l.b16 %v1050
        %v1115 = vunpack.c.h.b16 %v1050
        %v1116 = vunpack.c.l.b16 %v1051
        %v1117 = vunpack.c.h.b16 %v1051
        %v1118 = vunpack.c.l.b16 %v1052
        %v1119 = vunpack.c.h.b16 %v1052
        %v1120 = vunpack.c.l.b16 %v1053
        %v1121 = vunpack.c.h.b16 %v1053
        %v1122 = vunpack.c.l.b16 %v1054
        %v1123 = vunpack.c.h.b16 %v1054
        %v1124 = vunpack.c.l.b16 %v1055
        %v1125 = vunpack.c.h.b16 %v1055
        %v1126 = vunpack.c.l.b16 %v1056
        %v1127 = vunpack.c.h.b16 %v1056
        %v1128 = vunpack.c.l.b16 %v1057
        %v1129 = vunpack.c.h.b16 %v1057
        %v1130 = vunpack.c.l.b16 %v1058
        %v1131 = vunpack.c.h.b16 %v1058
        %v1132 = vunpack.c.l.b16 %v1059
        %v1133 = vunpack.c.h.b16 %v1059
        %v1134 = vunpack.c.l.b16 %v1060
        %v1135 = vunpack.c.h.b16 %v1060
        %v1136 = vunpack.c.l.b16 %v1061
        %v1137 = vunpack.c.h.b16 %v1061
        %v1138 = vunpack.c.l.b16 %v1062
        %v1139 = vunpack.c.h.b16 %v1062
        %v1140 = vunpack.c.l.b16 %v1063
        %v1141 = vunpack.c.h.b16 %v1063
        %v1142 = vunpack.c.l.b16 %v1064
        %v1143 = vunpack.c.h.b16 %v1064
        %v1144 = vunpack.c.l.b16 %v1065
        %v1145 = vunpack.c.h.b16 %v1065
        %v1146 = vunpack.c.l.b16 %v1066
        %v1147 = vunpack.c.h.b16 %v1066
        %v1148 = vunpack.c.l.b16 %v1067
        %v1149 = vunpack.c.h.b16 %v1067
        %v1150 = vunpack.c.l.b16 %v1068
        %v1151 = vunpack.c.h.b16 %v1068
        %v1152 = vunpack.c.l.b16 %v1069
        %v1153 = vunpack.c.h.b16 %v1069
        %v1154 = vunpack.c.l.b16 %v1070
        %v1155 = vunpack.c.h.b16 %v1070
        %v1156 = vunpack.c.l.b16 %v1071
        %v1157 = vunpack.c.h.b16 %v1071
        %v1158 = vunpack.c.l.b16 %v1072
        %v1159 = vunpack.c.h.b16 %v1072
        %v1160 = vunpack.c.l.b16 %v1073
        %v1161 = vunpack.c.h.b16 %v1073
        %v1162 = vunpack.c.l.b16 %v1074
        %v1163 = vunpack.c.h.b16 %v1074
        %v1164 = vunpack.c.l.b16 %v1075
        %v1165 = vunpack.c.h.b16 %v1075
        %v1166 = vunpack.c.l.b16 %v1076
        %v1167 = vunpack.c.h.b16 %v1076
        %v1168 = vunpack.c.l.b16 %v1077
        %v1169 = vunpack.c.h.b16 %v1077
        %v1170 = vunpack.c.l.b16 %v1078
        %v1171 = vunpack.c.h.b16 %v1078
        %v1172 = vunpack.c.l.b16 %v1079
        %v1173 = vunpack.c.h.b16 %v1079
        %v1174 = vunpack.c.l.b16 %v1080
        %v1175 = vunpack.c.h.b16 %v1080
        %v1176 = vunpack.c.l.b16 %v1081
        %v1177 = vunpack.c.h.b16 %v1081
        %v1178 = vpack.c.b16 %v1116, %v1114
        %v1179 = vpack.c.b16 %v1117, %v1115
        %v1180 = vpack.c.b16 %v1120, %v1118
        %v1181 = vpack.c.b16 %v1121, %v1119
        %v1182 = vpack.c.b16 %v1124, %v1122
        %v1183 = vpack.c.b16 %v1125, %v1123
        %v1184 = vpack.c.b16 %v1128, %v1126
        %v1185 = vpack.c.b16 %v1129, %v1127
        %v1186 = vpack.c.b16 %v1132, %v1130
        %v1187 = vpack.c.b16 %v1133, %v1131
        %v1188 = vpack.c.b16 %v1136, %v1134
        %v1189 = vpack.c.b16 %v1137, %v1135
        %v1190 = vpack.c.b16 %v1140, %v1138
        %v1191 = vpack.c.b16 %v1141, %v1139
        %v1192 = vpack.c.b16 %v1144, %v1142
        %v1193 = vpack.c.b16 %v1145, %v1143
        %v1194 = vpack.c.b16 %v1148, %v1146
        %v1195 = vpack.c.b16 %v1149, %v1147
        %v1196 = vpack.c.b16 %v1152, %v1150
        %v1197 = vpack.c.b16 %v1153, %v1151
        %v1198 = vpack.c.b16 %v1156, %v1154
        %v1199 = vpack.c.b16 %v1157, %v1155
        %v1200 = vpack.c.b16 %v1160, %v1158
        %v1201 = vpack.c.b16 %v1161, %v1159
        %v1202 = vpack.c.b16 %v1164, %v1162
        %v1203 = vpack.c.b16 %v1165, %v1163
        %v1204 = vpack.c.b16 %v1168, %v1166
        %v1205 = vpack.c.b16 %v1169, %v1167
        %v1206 = vpack.c.b16 %v1172, %v1170
        %v1207 = vpack.c.b16 %v1173, %v1171
        %v1208 = vpack.c.b16 %v1176, %v1174
        %v1209 = vpack.c.b16 %v1177, %v1175
        %1242 = vmatprep.subr.bf16.mxu0 %v1179
        %1243 = vmatpush1.bf16.msra.mxu0 %v1178
        %1244 = vmatprep.subr.bf16.mxu0 %v1181
        %1245 = vmatpush1.bf16.msra.mxu0 %v1180
        %1246 = vmatprep.subr.bf16.mxu0 %v1183
        %1247 = vmatpush1.bf16.msra.mxu0 %v1182
        %1248 = vmatprep.subr.bf16.mxu0 %v1185
        %1249 = vmatpush1.bf16.msra.mxu0 %v1184
        %1250 = vmatprep.subr.bf16.mxu0 %v1187
        %1251 = vmatpush1.bf16.msra.mxu0 %v1186
        %1252 = vmatprep.subr.bf16.mxu0 %v1189
        %1253 = vmatpush1.bf16.msra.mxu0 %v1188
        %1254 = vmatprep.subr.bf16.mxu0 %v1191
        %1255 = vmatpush1.bf16.msra.mxu0 %v1190
        %1256 = vmatprep.subr.bf16.mxu0 %v1193
        %1257 = vmatpush1.bf16.msra.mxu0 %v1192
        %1258 = vmatprep.subr.bf16.mxu0 %v1195
        %1259 = vmatpush1.bf16.msra.mxu0 %v1194
        %1260 = vmatprep.subr.bf16.mxu0 %v1197
        %1261 = vmatpush1.bf16.msra.mxu0 %v1196
        %1262 = vmatprep.subr.bf16.mxu0 %v1199
        %1263 = vmatpush1.bf16.msra.mxu0 %v1198
        %1264 = vmatprep.subr.bf16.mxu0 %v1201
        %1265 = vmatpush1.bf16.msra.mxu0 %v1200
        %1266 = vmatprep.subr.bf16.mxu0 %v1203
        %1267 = vmatpush1.bf16.msra.mxu0 %v1202
        %1268 = vmatprep.subr.bf16.mxu0 %v1205
        %1269 = vmatpush1.bf16.msra.mxu0 %v1204
        %1270 = vmatprep.subr.bf16.mxu0 %v1207
        %1271 = vmatpush1.bf16.msra.mxu0 %v1206
        %1272 = vmatprep.subr.bf16.mxu0 %v1209
        %1273 = vmatpush1.bf16.msra.mxu0 %v1208
        %1274 = vmatprep.mubr.bf16.mxu0 %v1043
        %1275 = vmatmul.mubr.bf16.gmra.mrb[0].mxu0 %v1042
        %v1276 = vpop.f32.mrb[0].mxu0
        %v1277 = vadd.f32 0.0, %v1276
        %v1278 = vpop.f32.mrb[0].mxu0
        %v1279 = vadd.f32 0.0, %v1278
        %v1280 = vpop.f32.mrb[0].mxu0
        %v1281 = vadd.f32 0.0, %v1280
        %v1282 = vpop.f32.mrb[0].mxu0
        %v1283 = vadd.f32 0.0, %v1282
        %1284 = vmatprep.mubr.bf16.mxu0 %v1045
        %1285 = vmatmul.mubr.bf16.gmra.mrb[0].mxu0 %v1044
        %v1286 = vpop.f32.mrb[0].mxu0
        %v1287 = vadd.f32 0.0, %v1286
        %v1288 = vpop.f32.mrb[0].mxu0
        %v1289 = vadd.f32 0.0, %v1288
        %v1290 = vpop.f32.mrb[0].mxu0
        %v1291 = vadd.f32 0.0, %v1290
        %v1292 = vpop.f32.mrb[0].mxu0
        %v1293 = vadd.f32 0.0, %v1292
        %1294 = vmatprep.mubr.bf16.mxu0 %v1047
        %1295 = vmatmul.mubr.bf16.gmra.mrb[0].mxu0 %v1046
        %v1296 = vpop.f32.mrb[0].mxu0
        %v1297 = vadd.f32 0.0, %v1296
        %v1298 = vpop.f32.mrb[0].mxu0
        %v1299 = vadd.f32 0.0, %v1298
        %v1300 = vpop.f32.mrb[0].mxu0
        %v1301 = vadd.f32 0.0, %v1300
        %v1302 = vpop.f32.mrb[0].mxu0
        %v1303 = vadd.f32 0.0, %v1302
        %1304 = vmatprep.mubr.bf16.mxu0 %v1049
        %1305 = vmatmul.mubr.bf16.gmra.mrb[0].mxu0 %v1048
        %v1306 = vpop.f32.mrb[0].mxu0
        %v1307 = vadd.f32 0.0, %v1306
        %v1308 = vpop.f32.mrb[0].mxu0
        %v1309 = vadd.f32 0.0, %v1308
        %v1310 = vpop.f32.mrb[0].mxu0
        %v1311 = vadd.f32 0.0, %v1310
        %v1312 = vpop.f32.mrb[0].mxu0
        %v1313 = vadd.f32 0.0, %v1312
        %1314 = vdwg.mxu0
        %v1315 = vadd.f32 %v1026, %v1277
        %v1316 = vadd.f32 %v1027, %v1279
        %v1317 = vadd.f32 %v1028, %v1281
        %v1318 = vadd.f32 %v1029, %v1283
        %v1319 = vadd.f32 %v1030, %v1287
        %v1320 = vadd.f32 %v1031, %v1289
        %v1321 = vadd.f32 %v1032, %v1291
        %v1322 = vadd.f32 %v1033, %v1293
        %v1323 = vadd.f32 %v1034, %v1297
        %v1324 = vadd.f32 %v1035, %v1299
        %v1325 = vadd.f32 %v1036, %v1301
        %v1326 = vadd.f32 %v1037, %v1303
        %v1327 = vadd.f32 %v1038, %v1307
        %v1328 = vadd.f32 %v1039, %v1309
        %v1329 = vadd.f32 %v1040, %v1311
        %v1330 = vadd.f32 %v1041, %v1313
        %1331 = vst [vmem:[#allocation2] sm:$0xff] %v1315
        %1332 = vst [vmem:[#allocation2 + $0x8] sm:$0xff] %v1316
        %1333 = vst [vmem:[#allocation2 + $0x10] sm:$0xff] %v1317
        %1334 = vst [vmem:[#allocation2 + $0x18] sm:$0xff] %v1318
        %1335 = vst [vmem:[#allocation2 + $0x20] sm:$0xff] %v1319
        %1336 = vst [vmem:[#allocation2 + $0x28] sm:$0xff] %v1320
        %1337 = vst [vmem:[#allocation2 + $0x30] sm:$0xff] %v1321
        %1338 = vst [vmem:[#allocation2 + $0x38] sm:$0xff] %v1322
        %1339 = vst [vmem:[#allocation2 + $0x40] sm:$0xff] %v1323
        %1340 = vst [vmem:[#allocation2 + $0x48] sm:$0xff] %v1324
        %1341 = vst [vmem:[#allocation2 + $0x50] sm:$0xff] %v1325
        %1342 = vst [vmem:[#allocation2 + $0x58] sm:$0xff] %v1326
        %1343 = vst [vmem:[#allocation2 + $0x60] sm:$0xff] %v1327
        %1344 = vst [vmem:[#allocation2 + $0x68] sm:$0xff] %v1328
        %1345 = vst [vmem:[#allocation2 + $0x70] sm:$0xff] %v1329
        %1346 = vst [vmem:[#allocation2 + $0x78] sm:$0xff] %v1330
        %v1347 = vld [vmem:[%s229 + $0x40] sm:$0xff]
        %v1348 = vld [vmem:[%s229 + $0x48] sm:$0xff]
        %v1349 = vld [vmem:[%s229 + $0x50] sm:$0xff]
        %v1350 = vld [vmem:[%s229 + $0x58] sm:$0xff]
        %v1351 = vld [vmem:[%s229 + $0x60] sm:$0xff]
        %v1352 = vld [vmem:[%s229 + $0x68] sm:$0xff]
        %v1353 = vld [vmem:[%s229 + $0x70] sm:$0xff]
        %v1354 = vld [vmem:[%s229 + $0x78] sm:$0xff]
        %v1355 = vld [vmem:[%s238] sm:$0xff]
        %v1356 = vld [vmem:[%s238 + $0x8] sm:$0xff]
        %v1357 = vld [vmem:[%s238 + $0x10] sm:$0xff]
        %v1358 = vld [vmem:[%s238 + $0x18] sm:$0xff]
        %v1359 = vld [vmem:[%s238 + $0x20] sm:$0xff]
        %v1360 = vld [vmem:[%s238 + $0x28] sm:$0xff]
        %v1361 = vld [vmem:[%s238 + $0x30] sm:$0xff]
        %v1362 = vld [vmem:[%s238 + $0x38] sm:$0xff]
        %v1363 = vld [vmem:[%s238 + $0x40] sm:$0xff]
        %v1364 = vld [vmem:[%s238 + $0x48] sm:$0xff]
        %v1365 = vld [vmem:[%s238 + $0x50] sm:$0xff]
        %v1366 = vld [vmem:[%s238 + $0x58] sm:$0xff]
        %v1367 = vld [vmem:[%s238 + $0x60] sm:$0xff]
        %v1368 = vld [vmem:[%s238 + $0x68] sm:$0xff]
        %v1369 = vld [vmem:[%s238 + $0x70] sm:$0xff]
        %v1370 = vld [vmem:[%s238 + $0x78] sm:$0xff]
        %v1371 = vld [vmem:[%s238 + $0x80] sm:$0xff]
        %v1372 = vld [vmem:[%s238 + $0x88] sm:$0xff]
        %v1373 = vld [vmem:[%s238 + $0x90] sm:$0xff]
        %v1374 = vld [vmem:[%s238 + $0x98] sm:$0xff]
        %v1375 = vld [vmem:[%s238 + $0xa0] sm:$0xff]
        %v1376 = vld [vmem:[%s238 + $0xa8] sm:$0xff]
        %v1377 = vld [vmem:[%s238 + $0xb0] sm:$0xff]
        %v1378 = vld [vmem:[%s238 + $0xb8] sm:$0xff]
        %v1379 = vld [vmem:[%s238 + $0xc0] sm:$0xff]
        %v1380 = vld [vmem:[%s238 + $0xc8] sm:$0xff]
        %v1381 = vld [vmem:[%s238 + $0xd0] sm:$0xff]
        %v1382 = vld [vmem:[%s238 + $0xd8] sm:$0xff]
        %v1383 = vld [vmem:[%s238 + $0xe0] sm:$0xff]
        %v1384 = vld [vmem:[%s238 + $0xe8] sm:$0xff]
        %v1385 = vld [vmem:[%s238 + $0xf0] sm:$0xff]
        %v1386 = vld [vmem:[%s238 + $0xf8] sm:$0xff]
        %v1387 = vld [vmem:[%s238 + $0x100] sm:$0xff]
        %v1388 = vld [vmem:[%s238 + $0x108] sm:$0xff]
        %v1389 = vld [vmem:[%s238 + $0x110] sm:$0xff]
        %v1390 = vld [vmem:[%s238 + $0x118] sm:$0xff]
        %v1391 = vld [vmem:[%s238 + $0x120] sm:$0xff]
        %v1392 = vld [vmem:[%s238 + $0x128] sm:$0xff]
        %v1393 = vld [vmem:[%s238 + $0x130] sm:$0xff]
        %v1394 = vld [vmem:[%s238 + $0x138] sm:$0xff]
        %v1395 = vld [vmem:[%s238 + $0x140] sm:$0xff]
        %v1396 = vld [vmem:[%s238 + $0x148] sm:$0xff]
        %v1397 = vld [vmem:[%s238 + $0x150] sm:$0xff]
        %v1398 = vld [vmem:[%s238 + $0x158] sm:$0xff]
        %v1399 = vld [vmem:[%s238 + $0x160] sm:$0xff]
        %v1400 = vld [vmem:[%s238 + $0x168] sm:$0xff]
        %v1401 = vld [vmem:[%s238 + $0x170] sm:$0xff]
        %v1402 = vld [vmem:[%s238 + $0x178] sm:$0xff]
        %v1403 = vld [vmem:[%s238 + $0x180] sm:$0xff]
        %v1404 = vld [vmem:[%s238 + $0x188] sm:$0xff]
        %v1405 = vld [vmem:[%s238 + $0x190] sm:$0xff]
        %v1406 = vld [vmem:[%s238 + $0x198] sm:$0xff]
        %v1407 = vld [vmem:[%s238 + $0x1a0] sm:$0xff]
        %v1408 = vld [vmem:[%s238 + $0x1a8] sm:$0xff]
        %v1409 = vld [vmem:[%s238 + $0x1b0] sm:$0xff]
        %v1410 = vld [vmem:[%s238 + $0x1b8] sm:$0xff]
        %v1411 = vld [vmem:[%s238 + $0x1c0] sm:$0xff]
        %v1412 = vld [vmem:[%s238 + $0x1c8] sm:$0xff]
        %v1413 = vld [vmem:[%s238 + $0x1d0] sm:$0xff]
        %v1414 = vld [vmem:[%s238 + $0x1d8] sm:$0xff]
        %v1415 = vld [vmem:[%s238 + $0x1e0] sm:$0xff]
        %v1416 = vld [vmem:[%s238 + $0x1e8] sm:$0xff]
        %v1417 = vld [vmem:[%s238 + $0x1f0] sm:$0xff]
        %v1418 = vld [vmem:[%s238 + $0x1f8] sm:$0xff]
        %v1427 = vunpack.c.l.b16 %v1347
        %v1428 = vunpack.c.h.b16 %v1347
        %v1429 = vunpack.c.l.b16 %v1348
        %v1430 = vunpack.c.h.b16 %v1348
        %v1431 = vunpack.c.l.b16 %v1349
        %v1432 = vunpack.c.h.b16 %v1349
        %v1433 = vunpack.c.l.b16 %v1350
        %v1434 = vunpack.c.h.b16 %v1350
        %v1435 = vunpack.c.l.b16 %v1351
        %v1436 = vunpack.c.h.b16 %v1351
        %v1437 = vunpack.c.l.b16 %v1352
        %v1438 = vunpack.c.h.b16 %v1352
        %v1439 = vunpack.c.l.b16 %v1353
        %v1440 = vunpack.c.h.b16 %v1353
        %v1441 = vunpack.c.l.b16 %v1354
        %v1442 = vunpack.c.h.b16 %v1354
        %v1443 = vpack.c.b16 %v1429, %v1427
        %v1444 = vpack.c.b16 %v1430, %v1428
        %v1445 = vpack.c.b16 %v1433, %v1431
        %v1446 = vpack.c.b16 %v1434, %v1432
        %v1447 = vpack.c.b16 %v1437, %v1435
        %v1448 = vpack.c.b16 %v1438, %v1436
        %v1449 = vpack.c.b16 %v1441, %v1439
        %v1450 = vpack.c.b16 %v1442, %v1440
        %v1523 = vunpack.c.l.b16 %v1355
        %v1524 = vunpack.c.h.b16 %v1355
        %v1525 = vunpack.c.l.b16 %v1356
        %v1526 = vunpack.c.h.b16 %v1356
        %v1527 = vunpack.c.l.b16 %v1357
        %v1528 = vunpack.c.h.b16 %v1357
        %v1529 = vunpack.c.l.b16 %v1358
        %v1530 = vunpack.c.h.b16 %v1358
        %v1531 = vunpack.c.l.b16 %v1359
        %v1532 = vunpack.c.h.b16 %v1359
        %v1533 = vunpack.c.l.b16 %v1360
        %v1534 = vunpack.c.h.b16 %v1360
        %v1535 = vunpack.c.l.b16 %v1361
        %v1536 = vunpack.c.h.b16 %v1361
        %v1537 = vunpack.c.l.b16 %v1362
        %v1538 = vunpack.c.h.b16 %v1362
        %v1539 = vunpack.c.l.b16 %v1363
        %v1540 = vunpack.c.h.b16 %v1363
        %v1541 = vunpack.c.l.b16 %v1364
        %v1542 = vunpack.c.h.b16 %v1364
        %v1543 = vunpack.c.l.b16 %v1365
        %v1544 = vunpack.c.h.b16 %v1365
        %v1545 = vunpack.c.l.b16 %v1366
        %v1546 = vunpack.c.h.b16 %v1366
        %v1547 = vunpack.c.l.b16 %v1367
        %v1548 = vunpack.c.h.b16 %v1367
        %v1549 = vunpack.c.l.b16 %v1368
        %v1550 = vunpack.c.h.b16 %v1368
        %v1551 = vunpack.c.l.b16 %v1369
        %v1552 = vunpack.c.h.b16 %v1369
        %v1553 = vunpack.c.l.b16 %v1370
        %v1554 = vunpack.c.h.b16 %v1370
        %v1555 = vunpack.c.l.b16 %v1371
        %v1556 = vunpack.c.h.b16 %v1371
        %v1557 = vunpack.c.l.b16 %v1372
        %v1558 = vunpack.c.h.b16 %v1372
        %v1559 = vunpack.c.l.b16 %v1373
        %v1560 = vunpack.c.h.b16 %v1373
        %v1561 = vunpack.c.l.b16 %v1374
        %v1562 = vunpack.c.h.b16 %v1374
        %v1563 = vunpack.c.l.b16 %v1375
        %v1564 = vunpack.c.h.b16 %v1375
        %v1565 = vunpack.c.l.b16 %v1376
        %v1566 = vunpack.c.h.b16 %v1376
        %v1567 = vunpack.c.l.b16 %v1377
        %v1568 = vunpack.c.h.b16 %v1377
        %v1569 = vunpack.c.l.b16 %v1378
        %v1570 = vunpack.c.h.b16 %v1378
        %v1571 = vunpack.c.l.b16 %v1379
        %v1572 = vunpack.c.h.b16 %v1379
        %v1573 = vunpack.c.l.b16 %v1380
        %v1574 = vunpack.c.h.b16 %v1380
        %v1575 = vunpack.c.l.b16 %v1381
        %v1576 = vunpack.c.h.b16 %v1381
        %v1577 = vunpack.c.l.b16 %v1382
        %v1578 = vunpack.c.h.b16 %v1382
        %v1579 = vunpack.c.l.b16 %v1383
        %v1580 = vunpack.c.h.b16 %v1383
        %v1581 = vunpack.c.l.b16 %v1384
        %v1582 = vunpack.c.h.b16 %v1384
        %v1583 = vunpack.c.l.b16 %v1385
        %v1584 = vunpack.c.h.b16 %v1385
        %v1585 = vunpack.c.l.b16 %v1386
        %v1586 = vunpack.c.h.b16 %v1386
        %v1587 = vunpack.c.l.b16 %v1387
        %v1588 = vunpack.c.h.b16 %v1387
        %v1589 = vunpack.c.l.b16 %v1388
        %v1590 = vunpack.c.h.b16 %v1388
        %v1591 = vunpack.c.l.b16 %v1389
        %v1592 = vunpack.c.h.b16 %v1389
        %v1593 = vunpack.c.l.b16 %v1390
        %v1594 = vunpack.c.h.b16 %v1390
        %v1595 = vunpack.c.l.b16 %v1391
        %v1596 = vunpack.c.h.b16 %v1391
        %v1597 = vunpack.c.l.b16 %v1392
        %v1598 = vunpack.c.h.b16 %v1392
        %v1599 = vunpack.c.l.b16 %v1393
        %v1600 = vunpack.c.h.b16 %v1393
        %v1601 = vunpack.c.l.b16 %v1394
        %v1602 = vunpack.c.h.b16 %v1394
        %v1603 = vunpack.c.l.b16 %v1395
        %v1604 = vunpack.c.h.b16 %v1395
        %v1605 = vunpack.c.l.b16 %v1396
        %v1606 = vunpack.c.h.b16 %v1396
        %v1607 = vunpack.c.l.b16 %v1397
        %v1608 = vunpack.c.h.b16 %v1397
        %v1609 = vunpack.c.l.b16 %v1398
        %v1610 = vunpack.c.h.b16 %v1398
        %v1611 = vunpack.c.l.b16 %v1399
        %v1612 = vunpack.c.h.b16 %v1399
        %v1613 = vunpack.c.l.b16 %v1400
        %v1614 = vunpack.c.h.b16 %v1400
        %v1615 = vunpack.c.l.b16 %v1401
        %v1616 = vunpack.c.h.b16 %v1401
        %v1617 = vunpack.c.l.b16 %v1402
        %v1618 = vunpack.c.h.b16 %v1402
        %v1619 = vunpack.c.l.b16 %v1403
        %v1620 = vunpack.c.h.b16 %v1403
        %v1621 = vunpack.c.l.b16 %v1404
        %v1622 = vunpack.c.h.b16 %v1404
        %v1623 = vunpack.c.l.b16 %v1405
        %v1624 = vunpack.c.h.b16 %v1405
        %v1625 = vunpack.c.l.b16 %v1406
        %v1626 = vunpack.c.h.b16 %v1406
        %v1627 = vunpack.c.l.b16 %v1407
        %v1628 = vunpack.c.h.b16 %v1407
        %v1629 = vunpack.c.l.b16 %v1408
        %v1630 = vunpack.c.h.b16 %v1408
        %v1631 = vunpack.c.l.b16 %v1409
        %v1632 = vunpack.c.h.b16 %v1409
        %v1633 = vunpack.c.l.b16 %v1410
        %v1634 = vunpack.c.h.b16 %v1410
        %v1635 = vunpack.c.l.b16 %v1411
        %v1636 = vunpack.c.h.b16 %v1411
        %v1637 = vunpack.c.l.b16 %v1412
        %v1638 = vunpack.c.h.b16 %v1412
        %v1639 = vunpack.c.l.b16 %v1413
        %v1640 = vunpack.c.h.b16 %v1413
        %v1641 = vunpack.c.l.b16 %v1414
        %v1642 = vunpack.c.h.b16 %v1414
        %v1643 = vunpack.c.l.b16 %v1415
        %v1644 = vunpack.c.h.b16 %v1415
        %v1645 = vunpack.c.l.b16 %v1416
        %v1646 = vunpack.c.h.b16 %v1416
        %v1647 = vunpack.c.l.b16 %v1417
        %v1648 = vunpack.c.h.b16 %v1417
        %v1649 = vunpack.c.l.b16 %v1418
        %v1650 = vunpack.c.h.b16 %v1418
        %v1651 = vpack.c.b16 %v1527, %v1523
        %v1652 = vpack.c.b16 %v1528, %v1524
        %v1653 = vpack.c.b16 %v1529, %v1525
        %v1654 = vpack.c.b16 %v1530, %v1526
        %v1655 = vpack.c.b16 %v1535, %v1531
        %v1656 = vpack.c.b16 %v1536, %v1532
        %v1657 = vpack.c.b16 %v1537, %v1533
        %v1658 = vpack.c.b16 %v1538, %v1534
        %v1659 = vpack.c.b16 %v1543, %v1539
        %v1660 = vpack.c.b16 %v1544, %v1540
        %v1661 = vpack.c.b16 %v1545, %v1541
        %v1662 = vpack.c.b16 %v1546, %v1542
        %v1663 = vpack.c.b16 %v1551, %v1547
        %v1664 = vpack.c.b16 %v1552, %v1548
        %v1665 = vpack.c.b16 %v1553, %v1549
        %v1666 = vpack.c.b16 %v1554, %v1550
        %v1667 = vpack.c.b16 %v1559, %v1555
        %v1668 = vpack.c.b16 %v1560, %v1556
        %v1669 = vpack.c.b16 %v1561, %v1557
        %v1670 = vpack.c.b16 %v1562, %v1558
        %v1671 = vpack.c.b16 %v1567, %v1563
        %v1672 = vpack.c.b16 %v1568, %v1564
        %v1673 = vpack.c.b16 %v1569, %v1565
        %v1674 = vpack.c.b16 %v1570, %v1566
        %v1675 = vpack.c.b16 %v1575, %v1571
        %v1676 = vpack.c.b16 %v1576, %v1572
        %v1677 = vpack.c.b16 %v1577, %v1573
        %v1678 = vpack.c.b16 %v1578, %v1574
        %v1679 = vpack.c.b16 %v1583, %v1579
        %v1680 = vpack.c.b16 %v1584, %v1580
        %v1681 = vpack.c.b16 %v1585, %v1581
        %v1682 = vpack.c.b16 %v1586, %v1582
        %v1683 = vpack.c.b16 %v1591, %v1587
        %v1684 = vpack.c.b16 %v1592, %v1588
        %v1685 = vpack.c.b16 %v1593, %v1589
        %v1686 = vpack.c.b16 %v1594, %v1590
        %v1687 = vpack.c.b16 %v1599, %v1595
        %v1688 = vpack.c.b16 %v1600, %v1596
        %v1689 = vpack.c.b16 %v1601, %v1597
        %v1690 = vpack.c.b16 %v1602, %v1598
        %v1691 = vpack.c.b16 %v1607, %v1603
        %v1692 = vpack.c.b16 %v1608, %v1604
        %v1693 = vpack.c.b16 %v1609, %v1605
        %v1694 = vpack.c.b16 %v1610, %v1606
        %v1695 = vpack.c.b16 %v1615, %v1611
        %v1696 = vpack.c.b16 %v1616, %v1612
        %v1697 = vpack.c.b16 %v1617, %v1613
        %v1698 = vpack.c.b16 %v1618, %v1614
        %v1699 = vpack.c.b16 %v1623, %v1619
        %v1700 = vpack.c.b16 %v1624, %v1620
        %v1701 = vpack.c.b16 %v1625, %v1621
        %v1702 = vpack.c.b16 %v1626, %v1622
        %v1703 = vpack.c.b16 %v1631, %v1627
        %v1704 = vpack.c.b16 %v1632, %v1628
        %v1705 = vpack.c.b16 %v1633, %v1629
        %v1706 = vpack.c.b16 %v1634, %v1630
        %v1707 = vpack.c.b16 %v1639, %v1635
        %v1708 = vpack.c.b16 %v1640, %v1636
        %v1709 = vpack.c.b16 %v1641, %v1637
        %v1710 = vpack.c.b16 %v1642, %v1638
        %v1711 = vpack.c.b16 %v1647, %v1643
        %v1712 = vpack.c.b16 %v1648, %v1644
        %v1713 = vpack.c.b16 %v1649, %v1645
        %v1714 = vpack.c.b16 %v1650, %v1646
        %1779 = vmatprep.subr.bf16.mxu0 %v1652
        %1780 = vmatpush1.bf16.msra.mxu0 %v1651
        %1781 = vmatprep.subr.bf16.mxu0 %v1656
        %1782 = vmatpush1.bf16.msra.mxu0 %v1655
        %1783 = vmatprep.subr.bf16.mxu0 %v1660
        %1784 = vmatpush1.bf16.msra.mxu0 %v1659
        %1785 = vmatprep.subr.bf16.mxu0 %v1664
        %1786 = vmatpush1.bf16.msra.mxu0 %v1663
        %1787 = vmatprep.subr.bf16.mxu0 %v1668
        %1788 = vmatpush1.bf16.msra.mxu0 %v1667
        %1789 = vmatprep.subr.bf16.mxu0 %v1672
        %1790 = vmatpush1.bf16.msra.mxu0 %v1671
        %1791 = vmatprep.subr.bf16.mxu0 %v1676
        %1792 = vmatpush1.bf16.msra.mxu0 %v1675
        %1793 = vmatprep.subr.bf16.mxu0 %v1680
        %1794 = vmatpush1.bf16.msra.mxu0 %v1679
        %1795 = vmatprep.subr.bf16.mxu0 %v1684
        %1796 = vmatpush1.bf16.msra.mxu0 %v1683
        %1797 = vmatprep.subr.bf16.mxu0 %v1688
        %1798 = vmatpush1.bf16.msra.mxu0 %v1687
        %1799 = vmatprep.subr.bf16.mxu0 %v1692
        %1800 = vmatpush1.bf16.msra.mxu0 %v1691
        %1801 = vmatprep.subr.bf16.mxu0 %v1696
        %1802 = vmatpush1.bf16.msra.mxu0 %v1695
        %1803 = vmatprep.subr.bf16.mxu0 %v1700
        %1804 = vmatpush1.bf16.msra.mxu0 %v1699
        %1805 = vmatprep.subr.bf16.mxu0 %v1704
        %1806 = vmatpush1.bf16.msra.mxu0 %v1703
        %1807 = vmatprep.subr.bf16.mxu0 %v1708
        %1808 = vmatpush1.bf16.msra.mxu0 %v1707
        %1809 = vmatprep.subr.bf16.mxu0 %v1712
        %1810 = vmatpush1.bf16.msra.mxu0 %v1711
        %1811 = vmatprep.mubr.bf16.mxu0 %v1444
        %1812 = vmatmul.mubr.bf16.gmra.mrb[0].mxu0 %v1443
        %v1813 = vpop.f32.mrb[0].mxu0
        %v1814 = vadd.f32 0.0, %v1813
        %v1815 = vpop.f32.mrb[0].mxu0
        %v1816 = vadd.f32 0.0, %v1815
        %v1817 = vpop.f32.mrb[0].mxu0
        %v1818 = vadd.f32 0.0, %v1817
        %v1819 = vpop.f32.mrb[0].mxu0
        %v1820 = vadd.f32 0.0, %v1819
        %1821 = vmatprep.mubr.bf16.mxu0 %v1446
        %1822 = vmatmul.mubr.bf16.gmra.mrb[0].mxu0 %v1445
        %v1823 = vpop.f32.mrb[0].mxu0
        %v1824 = vadd.f32 0.0, %v1823
        %v1825 = vpop.f32.mrb[0].mxu0
        %v1826 = vadd.f32 0.0, %v1825
        %v1827 = vpop.f32.mrb[0].mxu0
        %v1828 = vadd.f32 0.0, %v1827
        %v1829 = vpop.f32.mrb[0].mxu0
        %v1830 = vadd.f32 0.0, %v1829
        %1831 = vmatprep.mubr.bf16.mxu0 %v1448
        %1832 = vmatmul.mubr.bf16.gmra.mrb[0].mxu0 %v1447
        %v1833 = vpop.f32.mrb[0].mxu0
        %v1834 = vadd.f32 0.0, %v1833
        %v1835 = vpop.f32.mrb[0].mxu0
        %v1836 = vadd.f32 0.0, %v1835
        %v1837 = vpop.f32.mrb[0].mxu0
        %v1838 = vadd.f32 0.0, %v1837
        %v1839 = vpop.f32.mrb[0].mxu0
        %v1840 = vadd.f32 0.0, %v1839
        %1841 = vmatprep.mubr.bf16.mxu0 %v1450
        %1842 = vmatmul.mubr.bf16.gmra.mrb[0].mxu0 %v1449
        %v1843 = vpop.f32.mrb[0].mxu0
        %v1844 = vadd.f32 0.0, %v1843
        %v1845 = vpop.f32.mrb[0].mxu0
        %v1846 = vadd.f32 0.0, %v1845
        %v1847 = vpop.f32.mrb[0].mxu0
        %v1848 = vadd.f32 0.0, %v1847
        %v1849 = vpop.f32.mrb[0].mxu0
        %v1850 = vadd.f32 0.0, %v1849
        %1851 = vdwg.mxu0
        %1852 = vmatprep.subr.bf16.mxu0 %v1654
        %1853 = vmatpush1.bf16.msra.mxu0 %v1653
        %1854 = vmatprep.subr.bf16.mxu0 %v1658
        %1855 = vmatpush1.bf16.msra.mxu0 %v1657
        %1856 = vmatprep.subr.bf16.mxu0 %v1662
        %1857 = vmatpush1.bf16.msra.mxu0 %v1661
        %1858 = vmatprep.subr.bf16.mxu0 %v1666
        %1859 = vmatpush1.bf16.msra.mxu0 %v1665
        %1860 = vmatprep.subr.bf16.mxu0 %v1670
        %1861 = vmatpush1.bf16.msra.mxu0 %v1669
        %1862 = vmatprep.subr.bf16.mxu0 %v1674
        %1863 = vmatpush1.bf16.msra.mxu0 %v1673
        %1864 = vmatprep.subr.bf16.mxu0 %v1678
        %1865 = vmatpush1.bf16.msra.mxu0 %v1677
        %1866 = vmatprep.subr.bf16.mxu0 %v1682
        %1867 = vmatpush1.bf16.msra.mxu0 %v1681
        %1868 = vmatprep.subr.bf16.mxu0 %v1686
        %1869 = vmatpush1.bf16.msra.mxu0 %v1685
        %1870 = vmatprep.subr.bf16.mxu0 %v1690
        %1871 = vmatpush1.bf16.msra.mxu0 %v1689
        %1872 = vmatprep.subr.bf16.mxu0 %v1694
        %1873 = vmatpush1.bf16.msra.mxu0 %v1693
        %1874 = vmatprep.subr.bf16.mxu0 %v1698
        %1875 = vmatpush1.bf16.msra.mxu0 %v1697
        %1876 = vmatprep.subr.bf16.mxu0 %v1702
        %1877 = vmatpush1.bf16.msra.mxu0 %v1701
        %1878 = vmatprep.subr.bf16.mxu0 %v1706
        %1879 = vmatpush1.bf16.msra.mxu0 %v1705
        %1880 = vmatprep.subr.bf16.mxu0 %v1710
        %1881 = vmatpush1.bf16.msra.mxu0 %v1709
        %1882 = vmatprep.subr.bf16.mxu0 %v1714
        %1883 = vmatpush1.bf16.msra.mxu0 %v1713
        %1884 = vmatprep.mubr.bf16.mxu0 %v1444
        %1885 = vmatmul.mubr.bf16.gmra.mrb[0].mxu0 %v1443
        %v1886 = vpop.f32.mrb[0].mxu0
        %v1887 = vadd.f32 0.0, %v1886
        %v1888 = vpop.f32.mrb[0].mxu0
        %v1889 = vadd.f32 0.0, %v1888
        %v1890 = vpop.f32.mrb[0].mxu0
        %v1891 = vadd.f32 0.0, %v1890
        %v1892 = vpop.f32.mrb[0].mxu0
        %v1893 = vadd.f32 0.0, %v1892
        %1894 = vmatprep.mubr.bf16.mxu0 %v1446
        %1895 = vmatmul.mubr.bf16.gmra.mrb[0].mxu0 %v1445
        %v1896 = vpop.f32.mrb[0].mxu0
        %v1897 = vadd.f32 0.0, %v1896
        %v1898 = vpop.f32.mrb[0].mxu0
        %v1899 = vadd.f32 0.0, %v1898
        %v1900 = vpop.f32.mrb[0].mxu0
        %v1901 = vadd.f32 0.0, %v1900
        %v1902 = vpop.f32.mrb[0].mxu0
        %v1903 = vadd.f32 0.0, %v1902
        %1904 = vmatprep.mubr.bf16.mxu0 %v1448
        %1905 = vmatmul.mubr.bf16.gmra.mrb[0].mxu0 %v1447
        %v1906 = vpop.f32.mrb[0].mxu0
        %v1907 = vadd.f32 0.0, %v1906
        %v1908 = vpop.f32.mrb[0].mxu0
        %v1909 = vadd.f32 0.0, %v1908
        %v1910 = vpop.f32.mrb[0].mxu0
        %v1911 = vadd.f32 0.0, %v1910
        %v1912 = vpop.f32.mrb[0].mxu0
        %v1913 = vadd.f32 0.0, %v1912
        %1914 = vmatprep.mubr.bf16.mxu0 %v1450
        %1915 = vmatmul.mubr.bf16.gmra.mrb[0].mxu0 %v1449
        %v1916 = vpop.f32.mrb[0].mxu0
        %v1917 = vadd.f32 0.0, %v1916
        %v1918 = vpop.f32.mrb[0].mxu0
        %v1919 = vadd.f32 0.0, %v1918
        %v1920 = vpop.f32.mrb[0].mxu0
        %v1921 = vadd.f32 0.0, %v1920
        %v1922 = vpop.f32.mrb[0].mxu0
        %v1923 = vadd.f32 0.0, %v1922
        %1924 = vdwg.mxu0
        %v1925 = vxor.u32 %v1814, 2147483648
        %v1926 = vxor.u32 %v1816, 2147483648
        %v1927 = vxor.u32 %v1818, 2147483648
        %v1928 = vxor.u32 %v1820, 2147483648
        %v1929 = vxor.u32 %v1824, 2147483648
        %v1930 = vxor.u32 %v1826, 2147483648
        %v1931 = vxor.u32 %v1828, 2147483648
        %v1932 = vxor.u32 %v1830, 2147483648
        %v1933 = vxor.u32 %v1834, 2147483648
        %v1934 = vxor.u32 %v1836, 2147483648
        %v1935 = vxor.u32 %v1838, 2147483648
        %v1936 = vxor.u32 %v1840, 2147483648
        %v1937 = vxor.u32 %v1844, 2147483648
        %v1938 = vxor.u32 %v1846, 2147483648
        %v1939 = vxor.u32 %v1848, 2147483648
        %v1940 = vxor.u32 %v1850, 2147483648
        %v1941 = vmul.f32 %v1925, 1.442695
        %v1942 = vpow.pop %v1941
        %v1943 = vmul.f32 %v1926, 1.442695
        %v1944 = vpow.pop %v1943
        %v1945 = vmul.f32 %v1927, 1.442695
        %v1946 = vpow.pop %v1945
        %v1947 = vmul.f32 %v1928, 1.442695
        %v1948 = vpow.pop %v1947
        %v1949 = vmul.f32 %v1929, 1.442695
        %v1950 = vpow.pop %v1949
        %v1951 = vmul.f32 %v1930, 1.442695
        %v1952 = vpow.pop %v1951
        %v1953 = vmul.f32 %v1931, 1.442695
        %v1954 = vpow.pop %v1953
        %v1955 = vmul.f32 %v1932, 1.442695
        %v1956 = vpow.pop %v1955
        %v1957 = vmul.f32 %v1933, 1.442695
        %v1958 = vpow.pop %v1957
        %v1959 = vmul.f32 %v1934, 1.442695
        %v1960 = vpow.pop %v1959
        %v1961 = vmul.f32 %v1935, 1.442695
        %v1962 = vpow.pop %v1961
        %v1963 = vmul.f32 %v1936, 1.442695
        %v1964 = vpow.pop %v1963
        %v1965 = vmul.f32 %v1937, 1.442695
        %v1966 = vpow.pop %v1965
        %v1967 = vmul.f32 %v1938, 1.442695
        %v1968 = vpow.pop %v1967
        %v1969 = vmul.f32 %v1939, 1.442695
        %v1970 = vpow.pop %v1969
        %v1971 = vmul.f32 %v1940, 1.442695
        %v1972 = vpow.pop %v1971
        %v1973 = vadd.f32 %v1942, 1.0
        %v1974 = vadd.f32 %v1944, 1.0
        %v1975 = vadd.f32 %v1946, 1.0
        %v1976 = vadd.f32 %v1948, 1.0
        %v1977 = vadd.f32 %v1950, 1.0
        %v1978 = vadd.f32 %v1952, 1.0
        %v1979 = vadd.f32 %v1954, 1.0
        %v1980 = vadd.f32 %v1956, 1.0
        %v1981 = vadd.f32 %v1958, 1.0
        %v1982 = vadd.f32 %v1960, 1.0
        %v1983 = vadd.f32 %v1962, 1.0
        %v1984 = vadd.f32 %v1964, 1.0
        %v1985 = vadd.f32 %v1966, 1.0
        %v1986 = vadd.f32 %v1968, 1.0
        %v1987 = vadd.f32 %v1970, 1.0
        %v1988 = vadd.f32 %v1972, 1.0
        %v1989 = vrcp.pop %v1973
        %v1990 = vmul.f32 1.0, %v1989
        %v1991 = vrcp.pop %v1974
        %v1992 = vmul.f32 1.0, %v1991
        %v1993 = vrcp.pop %v1975
        %v1994 = vmul.f32 1.0, %v1993
        %v1995 = vrcp.pop %v1976
        %v1996 = vmul.f32 1.0, %v1995
        %v1997 = vrcp.pop %v1977
        %v1998 = vmul.f32 1.0, %v1997
        %v1999 = vrcp.pop %v1978
        %v2000 = vmul.f32 1.0, %v1999
        %v2001 = vrcp.pop %v1979
        %v2002 = vmul.f32 1.0, %v2001
        %v2003 = vrcp.pop %v1980
        %v2004 = vmul.f32 1.0, %v2003
        %v2005 = vrcp.pop %v1981
        %v2006 = vmul.f32 1.0, %v2005
        %v2007 = vrcp.pop %v1982
        %v2008 = vmul.f32 1.0, %v2007
        %v2009 = vrcp.pop %v1983
        %v2010 = vmul.f32 1.0, %v2009
        %v2011 = vrcp.pop %v1984
        %v2012 = vmul.f32 1.0, %v2011
        %v2013 = vrcp.pop %v1985
        %v2014 = vmul.f32 1.0, %v2013
        %v2015 = vrcp.pop %v1986
        %v2016 = vmul.f32 1.0, %v2015
        %v2017 = vrcp.pop %v1987
        %v2018 = vmul.f32 1.0, %v2017
        %v2019 = vrcp.pop %v1988
        %v2020 = vmul.f32 1.0, %v2019
        %v2021 = vmul.f32 %v1814, %v1990
        %v2022 = vmul.f32 %v1816, %v1992
        %v2023 = vmul.f32 %v1818, %v1994
        %v2024 = vmul.f32 %v1820, %v1996
        %v2025 = vmul.f32 %v1824, %v1998
        %v2026 = vmul.f32 %v1826, %v2000
        %v2027 = vmul.f32 %v1828, %v2002
        %v2028 = vmul.f32 %v1830, %v2004
        %v2029 = vmul.f32 %v1834, %v2006
        %v2030 = vmul.f32 %v1836, %v2008
        %v2031 = vmul.f32 %v1838, %v2010
        %v2032 = vmul.f32 %v1840, %v2012
        %v2033 = vmul.f32 %v1844, %v2014
        %v2034 = vmul.f32 %v1846, %v2016
        %v2035 = vmul.f32 %v1848, %v2018
        %v2036 = vmul.f32 %v1850, %v2020
        %v2037 = vmul.f32 %v2021, %v1887
        %v2038 = vmul.f32 %v2022, %v1889
        %v2039 = vmul.f32 %v2023, %v1891
        %v2040 = vmul.f32 %v2024, %v1893
        %v2041 = vmul.f32 %v2025, %v1897
        %v2042 = vmul.f32 %v2026, %v1899
        %v2043 = vmul.f32 %v2027, %v1901
        %v2044 = vmul.f32 %v2028, %v1903
        %v2045 = vmul.f32 %v2029, %v1907
        %v2046 = vmul.f32 %v2030, %v1909
        %v2047 = vmul.f32 %v2031, %v1911
        %v2048 = vmul.f32 %v2032, %v1913
        %v2049 = vmul.f32 %v2033, %v1917
        %v2050 = vmul.f32 %v2034, %v1919
        %v2051 = vmul.f32 %v2035, %v1921
        %v2052 = vmul.f32 %v2036, %v1923
        %v2053 = vld [vmem:[#allocation2 + $0x80] sm:$0xff]
        %v2054 = vld [vmem:[#allocation2 + $0x88] sm:$0xff]
        %v2055 = vld [vmem:[#allocation2 + $0x90] sm:$0xff]
        %v2056 = vld [vmem:[#allocation2 + $0x98] sm:$0xff]
        %v2057 = vld [vmem:[#allocation2 + $0xa0] sm:$0xff]
        %v2058 = vld [vmem:[#allocation2 + $0xa8] sm:$0xff]
        %v2059 = vld [vmem:[#allocation2 + $0xb0] sm:$0xff]
        %v2060 = vld [vmem:[#allocation2 + $0xb8] sm:$0xff]
        %v2061 = vld [vmem:[#allocation2 + $0xc0] sm:$0xff]
        %v2062 = vld [vmem:[#allocation2 + $0xc8] sm:$0xff]
        %v2063 = vld [vmem:[#allocation2 + $0xd0] sm:$0xff]
        %v2064 = vld [vmem:[#allocation2 + $0xd8] sm:$0xff]
        %v2065 = vld [vmem:[#allocation2 + $0xe0] sm:$0xff]
        %v2066 = vld [vmem:[#allocation2 + $0xe8] sm:$0xff]
        %v2067 = vld [vmem:[#allocation2 + $0xf0] sm:$0xff]
        %v2068 = vld [vmem:[#allocation2 + $0xf8] sm:$0xff]
        %v2069 = vpack.c.bf16 %v2039, %v2037
        %v2070 = vpack.c.bf16 %v2040, %v2038
        %v2071 = vpack.c.bf16 %v2043, %v2041
        %v2072 = vpack.c.bf16 %v2044, %v2042
        %v2073 = vpack.c.bf16 %v2047, %v2045
        %v2074 = vpack.c.bf16 %v2048, %v2046
        %v2075 = vpack.c.bf16 %v2051, %v2049
        %v2076 = vpack.c.bf16 %v2052, %v2050
        %v2077 = vld [vmem:[%s247] sm:$0xff]
        %v2078 = vld [vmem:[%s247 + $0x8] sm:$0xff]
        %v2079 = vld [vmem:[%s247 + $0x10] sm:$0xff]
        %v2080 = vld [vmem:[%s247 + $0x18] sm:$0xff]
        %v2081 = vld [vmem:[%s247 + $0x20] sm:$0xff]
        %v2082 = vld [vmem:[%s247 + $0x28] sm:$0xff]
        %v2083 = vld [vmem:[%s247 + $0x30] sm:$0xff]
        %v2084 = vld [vmem:[%s247 + $0x38] sm:$0xff]
        %v2085 = vld [vmem:[%s247 + $0x40] sm:$0xff]
        %v2086 = vld [vmem:[%s247 + $0x48] sm:$0xff]
        %v2087 = vld [vmem:[%s247 + $0x50] sm:$0xff]
        %v2088 = vld [vmem:[%s247 + $0x58] sm:$0xff]
        %v2089 = vld [vmem:[%s247 + $0x60] sm:$0xff]
        %v2090 = vld [vmem:[%s247 + $0x68] sm:$0xff]
        %v2091 = vld [vmem:[%s247 + $0x70] sm:$0xff]
        %v2092 = vld [vmem:[%s247 + $0x78] sm:$0xff]
        %v2093 = vld [vmem:[%s247 + $0x80] sm:$0xff]
        %v2094 = vld [vmem:[%s247 + $0x88] sm:$0xff]
        %v2095 = vld [vmem:[%s247 + $0x90] sm:$0xff]
        %v2096 = vld [vmem:[%s247 + $0x98] sm:$0xff]
        %v2097 = vld [vmem:[%s247 + $0xa0] sm:$0xff]
        %v2098 = vld [vmem:[%s247 + $0xa8] sm:$0xff]
        %v2099 = vld [vmem:[%s247 + $0xb0] sm:$0xff]
        %v2100 = vld [vmem:[%s247 + $0xb8] sm:$0xff]
        %v2101 = vld [vmem:[%s247 + $0xc0] sm:$0xff]
        %v2102 = vld [vmem:[%s247 + $0xc8] sm:$0xff]
        %v2103 = vld [vmem:[%s247 + $0xd0] sm:$0xff]
        %v2104 = vld [vmem:[%s247 + $0xd8] sm:$0xff]
        %v2105 = vld [vmem:[%s247 + $0xe0] sm:$0xff]
        %v2106 = vld [vmem:[%s247 + $0xe8] sm:$0xff]
        %v2107 = vld [vmem:[%s247 + $0xf0] sm:$0xff]
        %v2108 = vld [vmem:[%s247 + $0xf8] sm:$0xff]
        %v2141 = vunpack.c.l.b16 %v2077
        %v2142 = vunpack.c.h.b16 %v2077
        %v2143 = vunpack.c.l.b16 %v2078
        %v2144 = vunpack.c.h.b16 %v2078
        %v2145 = vunpack.c.l.b16 %v2079
        %v2146 = vunpack.c.h.b16 %v2079
        %v2147 = vunpack.c.l.b16 %v2080
        %v2148 = vunpack.c.h.b16 %v2080
        %v2149 = vunpack.c.l.b16 %v2081
        %v2150 = vunpack.c.h.b16 %v2081
        %v2151 = vunpack.c.l.b16 %v2082
        %v2152 = vunpack.c.h.b16 %v2082
        %v2153 = vunpack.c.l.b16 %v2083
        %v2154 = vunpack.c.h.b16 %v2083
        %v2155 = vunpack.c.l.b16 %v2084
        %v2156 = vunpack.c.h.b16 %v2084
        %v2157 = vunpack.c.l.b16 %v2085
        %v2158 = vunpack.c.h.b16 %v2085
        %v2159 = vunpack.c.l.b16 %v2086
        %v2160 = vunpack.c.h.b16 %v2086
        %v2161 = vunpack.c.l.b16 %v2087
        %v2162 = vunpack.c.h.b16 %v2087
        %v2163 = vunpack.c.l.b16 %v2088
        %v2164 = vunpack.c.h.b16 %v2088
        %v2165 = vunpack.c.l.b16 %v2089
        %v2166 = vunpack.c.h.b16 %v2089
        %v2167 = vunpack.c.l.b16 %v2090
        %v2168 = vunpack.c.h.b16 %v2090
        %v2169 = vunpack.c.l.b16 %v2091
        %v2170 = vunpack.c.h.b16 %v2091
        %v2171 = vunpack.c.l.b16 %v2092
        %v2172 = vunpack.c.h.b16 %v2092
        %v2173 = vunpack.c.l.b16 %v2093
        %v2174 = vunpack.c.h.b16 %v2093
        %v2175 = vunpack.c.l.b16 %v2094
        %v2176 = vunpack.c.h.b16 %v2094
        %v2177 = vunpack.c.l.b16 %v2095
        %v2178 = vunpack.c.h.b16 %v2095
        %v2179 = vunpack.c.l.b16 %v2096
        %v2180 = vunpack.c.h.b16 %v2096
        %v2181 = vunpack.c.l.b16 %v2097
        %v2182 = vunpack.c.h.b16 %v2097
        %v2183 = vunpack.c.l.b16 %v2098
        %v2184 = vunpack.c.h.b16 %v2098
        %v2185 = vunpack.c.l.b16 %v2099
        %v2186 = vunpack.c.h.b16 %v2099
        %v2187 = vunpack.c.l.b16 %v2100
        %v2188 = vunpack.c.h.b16 %v2100
        %v2189 = vunpack.c.l.b16 %v2101
        %v2190 = vunpack.c.h.b16 %v2101
        %v2191 = vunpack.c.l.b16 %v2102
        %v2192 = vunpack.c.h.b16 %v2102
        %v2193 = vunpack.c.l.b16 %v2103
        %v2194 = vunpack.c.h.b16 %v2103
        %v2195 = vunpack.c.l.b16 %v2104
        %v2196 = vunpack.c.h.b16 %v2104
        %v2197 = vunpack.c.l.b16 %v2105
        %v2198 = vunpack.c.h.b16 %v2105
        %v2199 = vunpack.c.l.b16 %v2106
        %v2200 = vunpack.c.h.b16 %v2106
        %v2201 = vunpack.c.l.b16 %v2107
        %v2202 = vunpack.c.h.b16 %v2107
        %v2203 = vunpack.c.l.b16 %v2108
        %v2204 = vunpack.c.h.b16 %v2108
        %v2205 = vpack.c.b16 %v2143, %v2141
        %v2206 = vpack.c.b16 %v2144, %v2142
        %v2207 = vpack.c.b16 %v2147, %v2145
        %v2208 = vpack.c.b16 %v2148, %v2146
        %v2209 = vpack.c.b16 %v2151, %v2149
        %v2210 = vpack.c.b16 %v2152, %v2150
        %v2211 = vpack.c.b16 %v2155, %v2153
        %v2212 = vpack.c.b16 %v2156, %v2154
        %v2213 = vpack.c.b16 %v2159, %v2157
        %v2214 = vpack.c.b16 %v2160, %v2158
        %v2215 = vpack.c.b16 %v2163, %v2161
        %v2216 = vpack.c.b16 %v2164, %v2162
        %v2217 = vpack.c.b16 %v2167, %v2165
        %v2218 = vpack.c.b16 %v2168, %v2166
        %v2219 = vpack.c.b16 %v2171, %v2169
        %v2220 = vpack.c.b16 %v2172, %v2170
        %v2221 = vpack.c.b16 %v2175, %v2173
        %v2222 = vpack.c.b16 %v2176, %v2174
        %v2223 = vpack.c.b16 %v2179, %v2177
        %v2224 = vpack.c.b16 %v2180, %v2178
        %v2225 = vpack.c.b16 %v2183, %v2181
        %v2226 = vpack.c.b16 %v2184, %v2182
        %v2227 = vpack.c.b16 %v2187, %v2185
        %v2228 = vpack.c.b16 %v2188, %v2186
        %v2229 = vpack.c.b16 %v2191, %v2189
        %v2230 = vpack.c.b16 %v2192, %v2190
        %v2231 = vpack.c.b16 %v2195, %v2193
        %v2232 = vpack.c.b16 %v2196, %v2194
        %v2233 = vpack.c.b16 %v2199, %v2197
        %v2234 = vpack.c.b16 %v2200, %v2198
        %v2235 = vpack.c.b16 %v2203, %v2201
        %v2236 = vpack.c.b16 %v2204, %v2202
        %2269 = vmatprep.subr.bf16.mxu0 %v2206
        %2270 = vmatpush1.bf16.msra.mxu0 %v2205
        %2271 = vmatprep.subr.bf16.mxu0 %v2208
        %2272 = vmatpush1.bf16.msra.mxu0 %v2207
        %2273 = vmatprep.subr.bf16.mxu0 %v2210
        %2274 = vmatpush1.bf16.msra.mxu0 %v2209
        %2275 = vmatprep.subr.bf16.mxu0 %v2212
        %2276 = vmatpush1.bf16.msra.mxu0 %v2211
        %2277 = vmatprep.subr.bf16.mxu0 %v2214
        %2278 = vmatpush1.bf16.msra.mxu0 %v2213
        %2279 = vmatprep.subr.bf16.mxu0 %v2216
        %2280 = vmatpush1.bf16.msra.mxu0 %v2215
        %2281 = vmatprep.subr.bf16.mxu0 %v2218
        %2282 = vmatpush1.bf16.msra.mxu0 %v2217
        %2283 = vmatprep.subr.bf16.mxu0 %v2220
        %2284 = vmatpush1.bf16.msra.mxu0 %v2219
        %2285 = vmatprep.subr.bf16.mxu0 %v2222
        %2286 = vmatpush1.bf16.msra.mxu0 %v2221
        %2287 = vmatprep.subr.bf16.mxu0 %v2224
        %2288 = vmatpush1.bf16.msra.mxu0 %v2223
        %2289 = vmatprep.subr.bf16.mxu0 %v2226
        %2290 = vmatpush1.bf16.msra.mxu0 %v2225
        %2291 = vmatprep.subr.bf16.mxu0 %v2228
        %2292 = vmatpush1.bf16.msra.mxu0 %v2227
        %2293 = vmatprep.subr.bf16.mxu0 %v2230
        %2294 = vmatpush1.bf16.msra.mxu0 %v2229
        %2295 = vmatprep.subr.bf16.mxu0 %v2232
        %2296 = vmatpush1.bf16.msra.mxu0 %v2231
        %2297 = vmatprep.subr.bf16.mxu0 %v2234
        %2298 = vmatpush1.bf16.msra.mxu0 %v2233
        %2299 = vmatprep.subr.bf16.mxu0 %v2236
        %2300 = vmatpush1.bf16.msra.mxu0 %v2235
        %2301 = vmatprep.mubr.bf16.mxu0 %v2070
        %2302 = vmatmul.mubr.bf16.gmra.mrb[0].mxu0 %v2069
        %v2303 = vpop.f32.mrb[0].mxu0
        %v2304 = vadd.f32 0.0, %v2303
        %v2305 = vpop.f32.mrb[0].mxu0
        %v2306 = vadd.f32 0.0, %v2305
        %v2307 = vpop.f32.mrb[0].mxu0
        %v2308 = vadd.f32 0.0, %v2307
        %v2309 = vpop.f32.mrb[0].mxu0
        %v2310 = vadd.f32 0.0, %v2309
        %2311 = vmatprep.mubr.bf16.mxu0 %v2072
        %2312 = vmatmul.mubr.bf16.gmra.mrb[0].mxu0 %v2071
        %v2313 = vpop.f32.mrb[0].mxu0
        %v2314 = vadd.f32 0.0, %v2313
        %v2315 = vpop.f32.mrb[0].mxu0
        %v2316 = vadd.f32 0.0, %v2315
        %v2317 = vpop.f32.mrb[0].mxu0
        %v2318 = vadd.f32 0.0, %v2317
        %v2319 = vpop.f32.mrb[0].mxu0
        %v2320 = vadd.f32 0.0, %v2319
        %2321 = vmatprep.mubr.bf16.mxu0 %v2074
        %2322 = vmatmul.mubr.bf16.gmra.mrb[0].mxu0 %v2073
        %v2323 = vpop.f32.mrb[0].mxu0
        %v2324 = vadd.f32 0.0, %v2323
        %v2325 = vpop.f32.mrb[0].mxu0
        %v2326 = vadd.f32 0.0, %v2325
        %v2327 = vpop.f32.mrb[0].mxu0
        %v2328 = vadd.f32 0.0, %v2327
        %v2329 = vpop.f32.mrb[0].mxu0
        %v2330 = vadd.f32 0.0, %v2329
        %2331 = vmatprep.mubr.bf16.mxu0 %v2076
        %2332 = vmatmul.mubr.bf16.gmra.mrb[0].mxu0 %v2075
        %v2333 = vpop.f32.mrb[0].mxu0
        %v2334 = vadd.f32 0.0, %v2333
        %v2335 = vpop.f32.mrb[0].mxu0
        %v2336 = vadd.f32 0.0, %v2335
        %v2337 = vpop.f32.mrb[0].mxu0
        %v2338 = vadd.f32 0.0, %v2337
        %v2339 = vpop.f32.mrb[0].mxu0
        %v2340 = vadd.f32 0.0, %v2339
        %2341 = vdwg.mxu0
        %v2342 = vadd.f32 %v2053, %v2304
        %v2343 = vadd.f32 %v2054, %v2306
        %v2344 = vadd.f32 %v2055, %v2308
        %v2345 = vadd.f32 %v2056, %v2310
        %v2346 = vadd.f32 %v2057, %v2314
        %v2347 = vadd.f32 %v2058, %v2316
        %v2348 = vadd.f32 %v2059, %v2318
        %v2349 = vadd.f32 %v2060, %v2320
        %v2350 = vadd.f32 %v2061, %v2324
        %v2351 = vadd.f32 %v2062, %v2326
        %v2352 = vadd.f32 %v2063, %v2328
        %v2353 = vadd.f32 %v2064, %v2330
        %v2354 = vadd.f32 %v2065, %v2334
        %v2355 = vadd.f32 %v2066, %v2336
        %v2356 = vadd.f32 %v2067, %v2338
        %v2357 = vadd.f32 %v2068, %v2340
        %2358 = vst [vmem:[#allocation2 + $0x80] sm:$0xff] %v2342
        %2359 = vst [vmem:[#allocation2 + $0x88] sm:$0xff] %v2343
        %2360 = vst [vmem:[#allocation2 + $0x90] sm:$0xff] %v2344
        %2361 = vst [vmem:[#allocation2 + $0x98] sm:$0xff] %v2345
        %2362 = vst [vmem:[#allocation2 + $0xa0] sm:$0xff] %v2346
        %2363 = vst [vmem:[#allocation2 + $0xa8] sm:$0xff] %v2347
        %2364 = vst [vmem:[#allocation2 + $0xb0] sm:$0xff] %v2348
        %2365 = vst [vmem:[#allocation2 + $0xb8] sm:$0xff] %v2349
        %2366 = vst [vmem:[#allocation2 + $0xc0] sm:$0xff] %v2350
        %2367 = vst [vmem:[#allocation2 + $0xc8] sm:$0xff] %v2351
        %2368 = vst [vmem:[#allocation2 + $0xd0] sm:$0xff] %v2352
        %2369 = vst [vmem:[#allocation2 + $0xd8] sm:$0xff] %v2353
        %2370 = vst [vmem:[#allocation2 + $0xe0] sm:$0xff] %v2354
        %2371 = vst [vmem:[#allocation2 + $0xe8] sm:$0xff] %v2355
        %2372 = vst [vmem:[#allocation2 + $0xf0] sm:$0xff] %v2356
        %2373 = vst [vmem:[#allocation2 + $0xf8] sm:$0xff] %v2357
        %p2374 = scmp.eq.s32.totalorder %s28, 1
        // Predicated region
        $region49: #{llama_mlp.1} parent=31 // pred_check
          %p2375 = pneg %p2374
        $region50: #{llama_mlp.1} parent=31 // pred_check_branch
          %2377 = sbr.rel (%p2375) target = $region52
        $region51: #{llama_mlp.1} parent=31 // pred_region
          %v2378 = vld [vmem:[#allocation2] sm:$0xff]
          %v2379 = vld [vmem:[#allocation2 + $0x8] sm:$0xff]
          %v2380 = vld [vmem:[#allocation2 + $0x10] sm:$0xff]
          %v2381 = vld [vmem:[#allocation2 + $0x18] sm:$0xff]
          %v2382 = vld [vmem:[#allocation2 + $0x20] sm:$0xff]
          %v2383 = vld [vmem:[#allocation2 + $0x28] sm:$0xff]
          %v2384 = vld [vmem:[#allocation2 + $0x30] sm:$0xff]
          %v2385 = vld [vmem:[#allocation2 + $0x38] sm:$0xff]
          %v2386 = vld [vmem:[#allocation2 + $0x40] sm:$0xff]
          %v2387 = vld [vmem:[#allocation2 + $0x48] sm:$0xff]
          %v2388 = vld [vmem:[#allocation2 + $0x50] sm:$0xff]
          %v2389 = vld [vmem:[#allocation2 + $0x58] sm:$0xff]
          %v2390 = vld [vmem:[#allocation2 + $0x60] sm:$0xff]
          %v2391 = vld [vmem:[#allocation2 + $0x68] sm:$0xff]
          %v2392 = vld [vmem:[#allocation2 + $0x70] sm:$0xff]
          %v2393 = vld [vmem:[#allocation2 + $0x78] sm:$0xff]
          %v2394 = vld [vmem:[#allocation2 + $0x80] sm:$0xff]
          %v2395 = vld [vmem:[#allocation2 + $0x88] sm:$0xff]
          %v2396 = vld [vmem:[#allocation2 + $0x90] sm:$0xff]
          %v2397 = vld [vmem:[#allocation2 + $0x98] sm:$0xff]
          %v2398 = vld [vmem:[#allocation2 + $0xa0] sm:$0xff]
          %v2399 = vld [vmem:[#allocation2 + $0xa8] sm:$0xff]
          %v2400 = vld [vmem:[#allocation2 + $0xb0] sm:$0xff]
          %v2401 = vld [vmem:[#allocation2 + $0xb8] sm:$0xff]
          %v2402 = vld [vmem:[#allocation2 + $0xc0] sm:$0xff]
          %v2403 = vld [vmem:[#allocation2 + $0xc8] sm:$0xff]
          %v2404 = vld [vmem:[#allocation2 + $0xd0] sm:$0xff]
          %v2405 = vld [vmem:[#allocation2 + $0xd8] sm:$0xff]
          %v2406 = vld [vmem:[#allocation2 + $0xe0] sm:$0xff]
          %v2407 = vld [vmem:[#allocation2 + $0xe8] sm:$0xff]
          %v2408 = vld [vmem:[#allocation2 + $0xf0] sm:$0xff]
          %v2409 = vld [vmem:[#allocation2 + $0xf8] sm:$0xff]
          %v2410 = vpack.c.bf16 %v2380, %v2378
          %v2411 = vpack.c.bf16 %v2381, %v2379
          %v2412 = vpack.c.bf16 %v2384, %v2382
          %v2413 = vpack.c.bf16 %v2385, %v2383
          %v2414 = vpack.c.bf16 %v2388, %v2386
          %v2415 = vpack.c.bf16 %v2389, %v2387
          %v2416 = vpack.c.bf16 %v2392, %v2390
          %v2417 = vpack.c.bf16 %v2393, %v2391
          %v2418 = vpack.c.bf16 %v2396, %v2394
          %v2419 = vpack.c.bf16 %v2397, %v2395
          %v2420 = vpack.c.bf16 %v2400, %v2398
          %v2421 = vpack.c.bf16 %v2401, %v2399
          %v2422 = vpack.c.bf16 %v2404, %v2402
          %v2423 = vpack.c.bf16 %v2405, %v2403
          %v2424 = vpack.c.bf16 %v2408, %v2406
          %v2425 = vpack.c.bf16 %v2409, %v2407
          %v2442 = vunpack.c.l.b16 %v2410
          %v2443 = vunpack.c.l.b16 %v2411
          %v2444 = vunpack.c.h.b16 %v2410
          %v2445 = vunpack.c.h.b16 %v2411
          %v2446 = vunpack.c.l.b16 %v2412
          %v2447 = vunpack.c.l.b16 %v2413
          %v2448 = vunpack.c.h.b16 %v2412
          %v2449 = vunpack.c.h.b16 %v2413
          %v2450 = vunpack.c.l.b16 %v2414
          %v2451 = vunpack.c.l.b16 %v2415
          %v2452 = vunpack.c.h.b16 %v2414
          %v2453 = vunpack.c.h.b16 %v2415
          %v2454 = vunpack.c.l.b16 %v2416
          %v2455 = vunpack.c.l.b16 %v2417
          %v2456 = vunpack.c.h.b16 %v2416
          %v2457 = vunpack.c.h.b16 %v2417
          %v2458 = vunpack.c.l.b16 %v2418
          %v2459 = vunpack.c.l.b16 %v2419
          %v2460 = vunpack.c.h.b16 %v2418
          %v2461 = vunpack.c.h.b16 %v2419
          %v2462 = vunpack.c.l.b16 %v2420
          %v2463 = vunpack.c.l.b16 %v2421
          %v2464 = vunpack.c.h.b16 %v2420
          %v2465 = vunpack.c.h.b16 %v2421
          %v2466 = vunpack.c.l.b16 %v2422
          %v2467 = vunpack.c.l.b16 %v2423
          %v2468 = vunpack.c.h.b16 %v2422
          %v2469 = vunpack.c.h.b16 %v2423
          %v2470 = vunpack.c.l.b16 %v2424
          %v2471 = vunpack.c.l.b16 %v2425
          %v2472 = vunpack.c.h.b16 %v2424
          %v2473 = vunpack.c.h.b16 %v2425
          %v2474 = vpack.c.b16 %v2443, %v2442
          %v2475 = vpack.c.b16 %v2445, %v2444
          %v2476 = vpack.c.b16 %v2447, %v2446
          %v2477 = vpack.c.b16 %v2449, %v2448
          %v2478 = vpack.c.b16 %v2451, %v2450
          %v2479 = vpack.c.b16 %v2453, %v2452
          %v2480 = vpack.c.b16 %v2455, %v2454
          %v2481 = vpack.c.b16 %v2457, %v2456
          %v2482 = vpack.c.b16 %v2459, %v2458
          %v2483 = vpack.c.b16 %v2461, %v2460
          %v2484 = vpack.c.b16 %v2463, %v2462
          %v2485 = vpack.c.b16 %v2465, %v2464
          %v2486 = vpack.c.b16 %v2467, %v2466
          %v2487 = vpack.c.b16 %v2469, %v2468
          %v2488 = vpack.c.b16 %v2471, %v2470
          %v2489 = vpack.c.b16 %v2473, %v2472
          %2506 = vst [vmem:[%s279] sm:$0xff] %v2474
          %2507 = vst [vmem:[%s279 + $0x8] sm:$0xff] %v2475
          %2508 = vst [vmem:[%s279 + $0x10] sm:$0xff] %v2476
          %2509 = vst [vmem:[%s279 + $0x18] sm:$0xff] %v2477
          %2510 = vst [vmem:[%s279 + $0x20] sm:$0xff] %v2478
          %2511 = vst [vmem:[%s279 + $0x28] sm:$0xff] %v2479
          %2512 = vst [vmem:[%s279 + $0x30] sm:$0xff] %v2480
          %2513 = vst [vmem:[%s279 + $0x38] sm:$0xff] %v2481
          %2514 = vst [vmem:[%s279 + $0x40] sm:$0xff] %v2482
          %2515 = vst [vmem:[%s279 + $0x48] sm:$0xff] %v2483
          %2516 = vst [vmem:[%s279 + $0x50] sm:$0xff] %v2484
          %2517 = vst [vmem:[%s279 + $0x58] sm:$0xff] %v2485
          %2518 = vst [vmem:[%s279 + $0x60] sm:$0xff] %v2486
          %2519 = vst [vmem:[%s279 + $0x68] sm:$0xff] %v2487
          %2520 = vst [vmem:[%s279 + $0x70] sm:$0xff] %v2488
          %2521 = vst [vmem:[%s279 + $0x78] sm:$0xff] %v2489
        $region52: #{llama_mlp.1} parent=31 // pred_fallthru
          _
        %s2522 = sand.u32 %s121, 1
        %s2523 = scalar_lea.sflag [#allocation5], %s2522
        %s2524 = sand.u32 %s121, 1
        %s2525 = smul.addr %s2524, 128
        %s2526 = scalar_lea.vmem [#allocation9], %s2525
        // Predicated region
        $region53: #{llama_mlp.1} parent=31 // pred_check
          %p2527 = pneg %p131
        $region54: #{llama_mlp.1} parent=31 // pred_check_branch
          %2529 = sbr.rel (%p2527) target = $region56
        $region55: #{llama_mlp.1} parent=31 // pred_region
          %s2530 = smul.u32 16, %s27
          %s2532 = ssub.s32 2048, 2048
          %2533 = vsyncadd %s2523, %s2532
          %s2534 = smul.addr %s2530, 2
          %s2535 = smul.addr %s2534, 64
          %s2536 = scalar_lea.hbm %s3, %s2535
          %s2537 = sshll.u32 %s2526, 4
          %s2538 = int_to_ptr.vmem [resolvable:$true] %s2537
          %2543 = dma.vmem_to_hbm [thread:$0]  %s2538, 2048, %s2536, %s2523, 128, 128, 8
        $region56: #{llama_mlp.1} parent=31 // pred_fallthru
          _
      $region32: #{llama_mlp.1} parent=5 // pred_fallthru
        _
      %p2544 = scmp.le.s32.totalorder 2, %s18
      // Predicated region
      $region57: #{llama_mlp.1} parent=5 // pred_check
        %p2545 = pneg %p2544
      $region58: #{llama_mlp.1} parent=5 // pred_check_branch
        %2547 = sbr.rel (%p2545) target = $region60
      $region59: #{llama_mlp.1} parent=5 // pred_region
        %s2548 = ssub.s32 %s18, 2
        // Predicated region
        $region61: #{llama_mlp.1} parent=59 // pred_check
          %p2549 = pneg %p137
        $region62: #{llama_mlp.1} parent=59 // pred_check_branch
          %2551 = sbr.rel (%p2549) target = $region64
        $region63: #{llama_mlp.1} parent=59 // pred_region
          %s2552 = sand.u32 %s122, 1
          %s2553 = scalar_lea.sflag [#allocation5], %s2552
          %s2554 = sand.u32 %s122, 1
          %s2555 = smul.addr %s2554, 128
          %s2556 = scalar_lea.vmem [#allocation9], %s2555
          %2557 = dma.done %s2553, 2048
        $region64: #{llama_mlp.1} parent=59 // pred_fallthru
          _
      $region60: #{llama_mlp.1} parent=5 // pred_fallthru
        _
    $region6: #{llama_mlp.1} parent=1 // loop_footer
      %s22 = sadd.s32 1, %s18
    $region7: #{llama_mlp.1} parent=1 // loop_footer_branch
      %17 = sbr.rel target = $region3
    $region8: #{llama_mlp.1} parent=1 // loop_exit
      _
    %2558 = vsyncpa [#allocation4], 1
    %s2559 = scalar_lea.sflag [#allocation4], 1
    %2560 = vsyncpa %s2559, 1
    %2561 = vsyncpa [#allocation7], 1
    %s2562 = scalar_lea.sflag [#allocation7], 1
    %2563 = vsyncpa %s2562, 1
    %2564 = vsyncpa [#allocation5], 1
    %s2565 = scalar_lea.sflag [#allocation5], 1
    %2566 = vsyncpa %s2565, 1

</llo_original>
